<compile_context>
chip_gen: v6e
topology: v6e:2x2x1
jax: 0.10.0
libtpu: 0.0.40
codegen_flags: <defaults>
</compile_context>

<pallas_src>
import functools

import jax
import jax.numpy as jnp
import numpy as np
from jax.experimental import pallas as pl
from jax.experimental.pallas import tpu as pltpu


# ---------------------------------------------------------------------------
# Pallas kernel: fused (bi)directional LSTM recurrence over a time-chunk grid.
# ---------------------------------------------------------------------------
def _make_lstm_kernel(*, T, Tc, B, DH, G, num_chunks, unroll):
    """Kernel refs:
      gx_ref:   (Tc, B, G) bf16  fused x-projection (both directions, gate-major)
      whh_ref:  (DH, G)    bf16  block-diagonal hidden->hidden weights
      bias_ref: (1, G)     f32   fused b_ih + b_hh (permuted to gx layout)
      o_ref:    (B, DH)    f32   final hidden state, directions on the lane axis
      h_sc:     (B, DH)    bf16  VMEM scratch carry (persists across grid steps)
      c_sc:     (B, DH)    f32   VMEM scratch carry
    """
    needs_mask = (num_chunks * Tc != T)  # only if the last chunk is padded

    def kernel(gx_ref, whh_ref, bias_ref, o_ref, h_sc, c_sc):
        chunk = pl.program_id(0)

        @pl.when(chunk == 0)
        def _():
            h_sc[...] = jnp.zeros_like(h_sc)
            c_sc[...] = jnp.zeros_like(c_sc)

        # Hoisted out of the serial loop: resident weights, bias, lane mask.
        w_blk = whh_ref[...]                                   # (DH, G) bf16
        bias = bias_ref[...]                                   # (1, G)  f32
        lane = jax.lax.broadcasted_iota(jnp.int32, (B, G), 1)
        is_g_gate = (lane >= 2 * DH) & (lane < 3 * DH)

        def step(t, carry):
            h, c = carry                                       # bf16 (B,DH), f32 (B,DH)
            g_x = gx_ref[t].astype(jnp.float32)                # (B, G)
            # Single block-diagonal MXU matmul for both directions (f32 accumulate).
            g_h = jnp.dot(h, w_blk, preferred_element_type=jnp.float32)
            gates = g_x + g_h + bias                           # (B, G) f32
            # Two full-width EUP passes + a VPU select instead of per-gate slices.
            sig = jax.nn.sigmoid(gates)
            tnh = jnp.tanh(gates)
            act = jnp.where(is_g_gate, tnh, sig)               # [i | f | g | o], 2H each
            i_g = act[:, 0 * DH:1 * DH]
            f_g = act[:, 1 * DH:2 * DH]
            g_g = act[:, 2 * DH:3 * DH]
            o_g = act[:, 3 * DH:4 * DH]
            c_new = f_g * c + i_g * g_g
            h_new = (o_g * jnp.tanh(c_new)).astype(jnp.bfloat16)
            if needs_mask:
                valid = (chunk * Tc + t) < T                   # padded tail steps
                h_new = jnp.where(valid, h_new, h)
                c_new = jnp.where(valid, c_new, c)
            return h_new, c_new

        h_t, c_t = jax.lax.fori_loop(0, Tc, step, (h_sc[...], c_sc[...]),
                                     unroll=unroll)
        h_sc[...] = h_t
        c_sc[...] = c_t

        @pl.when(chunk == num_chunks - 1)
        def _():
            o_ref[...] = h_t.astype(jnp.float32)               # single lane-dense store

    return kernel


def lstm_last_hidden(gx, w_blk, bias, *, T, B, H, D):
    """Run the fused recurrence; returns (B, D*H) final hidden states (fwd | bwd)."""
    DH, G = D * H, 4 * D * H
    Tc = min(T, 64)                     # time-chunk size (bounds VMEM residency)
    num_chunks = pl.cdiv(T, Tc)
    t_pad = num_chunks * Tc
    if t_pad != T:
        gx = jnp.pad(gx, ((0, t_pad - T), (0, 0), (0, 0)))
    unroll = min(Tc, 8)

    kernel = _make_lstm_kernel(T=T, Tc=Tc, B=B, DH=DH, G=G,
                               num_chunks=num_chunks, unroll=unroll)

    # VMEM budget: double-buffered gx chunk + resident weights/bias/out/scratch.
    needed = (2 * Tc * B * G * 2          # gx blocks (bf16, 2 pipeline buffers)
              + DH * G * 2                # block-diag weights (bf16)
              + G * 4 + B * DH * 4        # bias + output
              + B * DH * (2 + 4))         # h/c scratch
    vmem_limit = int(min(64 * 2 ** 20, max(4 * needed, 32 * 2 ** 20)))

    return pl.pallas_call(
        kernel,
        out_shape=jax.ShapeDtypeStruct((B, DH), jnp.float32),
        grid_spec=pltpu.PrefetchScalarGridSpec(
            num_scalar_prefetch=0,
            grid=(num_chunks,),
            in_specs=[
                pl.BlockSpec((Tc, B, G), lambda i: (i, 0, 0)),   # streamed gx chunk
                pl.BlockSpec((DH, G), lambda i: (0, 0)),         # resident weights
                pl.BlockSpec((1, G), lambda i: (0, 0)),          # resident bias
            ],
            out_specs=pl.BlockSpec((B, DH), lambda i: (0, 0)),
            scratch_shapes=[
                pltpu.VMEM((B, DH), jnp.bfloat16),               # h carry
                pltpu.VMEM((B, DH), jnp.float32),                # c carry
            ],
        ),
        compiler_params=pltpu.CompilerParams(
            dimension_semantics=("arbitrary",),                  # serial recurrence
            vmem_limit_bytes=vmem_limit,
        ),
    )(gx, w_blk, bias)


# ---------------------------------------------------------------------------
# Wrapper: Encoder.forward
# ---------------------------------------------------------------------------
def encoder_forward(inputs, params, num_directions):
    """inputs: int32 (B, T) token ids -> (B, num_directions * H) last hidden state."""
    # Embedding gather stays as XLA glue (data-dependent gather).
    emb = jnp.take(params["embeddings"], inputs, axis=0)          # (B, T, E) f32
    B, T, _ = emb.shape
    H = params["w_hh_l0"].shape[1]
    D = num_directions
    DH, G = D * H, 4 * D * H
    emb_bf = emb.astype(jnp.bfloat16)

    if D == 2:
        w_ih = jnp.stack([jnp.asarray(params["w_ih_l0"], jnp.float32),
                          jnp.asarray(params["w_ih_l0_rev"], jnp.float32)], axis=0)
        w_hh_list = [params["w_hh_l0"], params["w_hh_l0_rev"]]
        bias_list = [jnp.asarray(params["b_ih_l0"], jnp.float32)
                     + jnp.asarray(params["b_hh_l0"], jnp.float32),
                     jnp.asarray(params["b_ih_l0_rev"], jnp.float32)
                     + jnp.asarray(params["b_hh_l0_rev"], jnp.float32)]
    else:
        w_ih = jnp.asarray(params["w_ih_l0"], jnp.float32)[None]
        w_hh_list = [params["w_hh_l0"]]
        bias_list = [jnp.asarray(params["b_ih_l0"], jnp.float32)
                     + jnp.asarray(params["b_hh_l0"], jnp.float32)]

    # Fused, hoisted input projection for all directions: one bf16 matmul, time-major.
    gx_all = jnp.einsum("bte,dge->dtbg", emb_bf, w_ih.astype(jnp.bfloat16),
                        preferred_element_type=jnp.float32)       # (D, T, B, 4H)
    gx_dirs = [gx_all[0]]
    if D == 2:
        gx_dirs.append(gx_all[1][::-1])                           # pre-reverse bwd time

    # Interleave gate-major then direction: lane = gate*D*H + dir*H + k. bf16 slab.
    stacked = jnp.stack([g.reshape(T, B, 4, H) for g in gx_dirs], axis=3)
    gx = stacked.reshape(T, B, G).astype(jnp.bfloat16)            # (T, B, 4*D*H)

    # Block-diagonal hidden->hidden weights (D*H, 4*D*H), same permuted gate layout.
    w_blk = jnp.zeros((DH, G), jnp.float32)
    for d in range(D):
        wt = jnp.asarray(w_hh_list[d], jnp.float32).T             # (H, 4H), order i,f,g,o
        for gi in range(4):
            w_blk = w_blk.at[d * H:(d + 1) * H,
                             gi * DH + d * H: gi * DH + (d + 1) * H].set(
                wt[:, gi * H:(gi + 1) * H])
    w_blk = w_blk.astype(jnp.bfloat16)

    # Fused bias in the permuted layout, added inside the kernel (no extra slab pass).
    bias_fused = jnp.stack([b.reshape(4, H) for b in bias_list], axis=1).reshape(1, G)

    # Output is already torch.cat((last_hidden[0], last_hidden[-1]), 1) for D == 2,
    # and last_hidden.squeeze(0) for D == 1.
    return lstm_last_hidden(gx, w_blk, bias_fused, T=T, B=B, H=H, D=D)


# ---------------------------------------------------------------------------
# Pure-JAX f32 reference (lax.scan), mirroring torch.nn.LSTM eval semantics.
# ---------------------------------------------------------------------------
def _reference_forward(inputs, params, num_directions):
    emb = jnp.take(params["embeddings"], inputs, axis=0)          # (B, T, E)
    x_tbe = jnp.transpose(emb, (1, 0, 2)).astype(jnp.float32)

    def run(x, w_ih, w_hh, b_ih, b_hh):
        H = w_hh.shape[1]
        b = (b_ih + b_hh)[None, :]

        def step(carry, x_t):
            h, c = carry
            gates = x_t @ w_ih.T + h @ w_hh.T + b
            i = jax.nn.sigmoid(gates[:, 0 * H:1 * H])
            f = jax.nn.sigmoid(gates[:, 1 * H:2 * H])
            g = jnp.tanh(gates[:, 2 * H:3 * H])
            o = jax.nn.sigmoid(gates[:, 3 * H:4 * H])
            c = f * c + i * g
            h = o * jnp.tanh(c)
            return (h, c), None

        B = x.shape[1]
        init = (jnp.zeros((B, H), jnp.float32), jnp.zeros((B, H), jnp.float32))
        (h, _), _ = jax.lax.scan(step, init, x)
        return h

    h_fwd = run(x_tbe, params["w_ih_l0"], params["w_hh_l0"],
                params["b_ih_l0"], params["b_hh_l0"])
    if num_directions == 1:
        return h_fwd
    h_bwd = run(x_tbe[::-1], params["w_ih_l0_rev"], params["w_hh_l0_rev"],
                params["b_ih_l0_rev"], params["b_hh_l0_rev"])
    return jnp.concatenate([h_fwd, h_bwd], axis=1)


if __name__ == "__main__":
    VOCAB, EMB, HIDDEN = 20, 16, 32
    BATCH, SEQ = 2, 8

    key = jax.random.PRNGKey(0)
    keys = jax.random.split(key, 12)

    def uinit(k, shape, scale):
        return jax.random.uniform(k, shape, jnp.float32, -scale, scale)

    s = 1.0 / np.sqrt(HIDDEN)  # PyTorch LSTM default init range
    params = {
        "embeddings": jax.random.normal(keys[0], (VOCAB, EMB), jnp.float32),
        "w_ih_l0": uinit(keys[1], (4 * HIDDEN, EMB), s),
        "w_hh_l0": uinit(keys[2], (4 * HIDDEN, HIDDEN), s),
        "b_ih_l0": uinit(keys[3], (4 * HIDDEN,), s),
        "b_hh_l0": uinit(keys[4], (4 * HIDDEN,), s),
        "w_ih_l0_rev": uinit(keys[5], (4 * HIDDEN, EMB), s),
        "w_hh_l0_rev": uinit(keys[6], (4 * HIDDEN, HIDDEN), s),
        "b_ih_l0_rev": uinit(keys[7], (4 * HIDDEN,), s),
        "b_hh_l0_rev": uinit(keys[8], (4 * HIDDEN,), s),
    }

    inputs = jax.random.randint(keys[9], (BATCH, SEQ), 0, VOCAB, dtype=jnp.int32)

    fwd = jax.jit(functools.partial(encoder_forward, num_directions=2))
    out2 = jax.block_until_ready(fwd(inputs, params))
    ref2 = jax.block_until_ready(_reference_forward(inputs, params, 2))
    assert out2.shape == (BATCH, 2 * HIDDEN), out2.shape
    np.testing.assert_allclose(np.asarray(out2), np.asarray(ref2), rtol=3e-2, atol=3e-2)

    fwd1 = jax.jit(functools.partial(encoder_forward, num_directions=1))
    out1 = jax.block_until_ready(fwd1(inputs, params))
    ref1 = jax.block_until_ready(_reference_forward(inputs, params, 1))
    assert out1.shape == (BATCH, HIDDEN), out1.shape
    np.testing.assert_allclose(np.asarray(out1), np.asarray(ref1), rtol=3e-2, atol=3e-2)

    print("KERNEL_OK")
</pallas_src>

<mosaic_0001>
module attributes {stable_mosaic.version = 11 : i64} {
  func.func @kernel(%arg0: i32, %arg1: memref<8x2x256xbf16, #tpu.memory_space<vmem>>, %arg2: memref<64x256xbf16, #tpu.memory_space<vmem>>, %arg3: memref<1x256xf32, #tpu.memory_space<vmem>>, %arg4: memref<2x64xf32, #tpu.memory_space<vmem>>, %arg5: memref<2x64xbf16, #tpu.memory_space<vmem>>, %arg6: memref<2x64xf32, #tpu.memory_space<vmem>>) attributes {dimension_semantics = [#tpu.dimension_semantics<arbitrary>], iteration_bounds = array<i64: 1>, scalar_prefetch = 0 : i64, scratch_operands = 2 : i64, tpu.core_type = #tpu.core_type<tc>, window_params = [{transform_indices = @transform_0, window_bounds = array<i64: 8, 2, 256>}, {pipeline_mode = #tpu.pipeline_mode<synchronous>, transform_indices = @transform_1, window_bounds = array<i64: 64, 256>}, {pipeline_mode = #tpu.pipeline_mode<synchronous>, transform_indices = @transform_2, window_bounds = array<i64: 1, 256>}, {pipeline_mode = #tpu.pipeline_mode<synchronous>, transform_indices = @transform_3, window_bounds = array<i64: 2, 64>}]} {
    %c0_i32 = arith.constant 0 : i32
    %0 = arith.cmpi eq, %arg0, %c0_i32 : i32
    %1 = arith.extui %0 : i1 to i32
    %c0_i32_0 = arith.constant 0 : i32
    %2 = arith.cmpi ne, %1, %c0_i32_0 : i32
    scf.if %2 {
      %cst_46 = arith.constant 0.000000e+00 : bf16
      %218 = vector.broadcast %cst_46 : bf16 to vector<2x64xbf16>
      %c0_47 = arith.constant 0 : index
      %c0_48 = arith.constant 0 : index
      %219 = vector.load %arg5[%c0_47, %c0_48] : memref<2x64xbf16, #tpu.memory_space<vmem>>, vector<2x64xbf16>
      tpu.vector_store %arg5[%c0_47, %c0_48], %218 {strides = array<i32>} : memref<2x64xbf16, #tpu.memory_space<vmem>>, vector<2x64xbf16>,
      %cst_49 = arith.constant 0.000000e+00 : f32
      %220 = vector.broadcast %cst_49 : f32 to vector<2x64xf32>
      %c0_50 = arith.constant 0 : index
      %c0_51 = arith.constant 0 : index
      %221 = vector.load %arg6[%c0_50, %c0_51] : memref<2x64xf32, #tpu.memory_space<vmem>>, vector<2x64xf32>
      tpu.vector_store %arg6[%c0_50, %c0_51], %220 {strides = array<i32>} : memref<2x64xf32, #tpu.memory_space<vmem>>, vector<2x64xf32>,
    } else {
    }
    %c0 = arith.constant 0 : index
    %c0_1 = arith.constant 0 : index
    %3 = vector.load %arg2[%c0, %c0_1] : memref<64x256xbf16, #tpu.memory_space<vmem>>, vector<64x256xbf16>
    %c0_2 = arith.constant 0 : index
    %c0_3 = arith.constant 0 : index
    %4 = vector.load %arg3[%c0_2, %c0_3] : memref<1x256xf32, #tpu.memory_space<vmem>>, vector<1x256xf32>
    %5 = tpu.iota {dimensions = array<i32: 1>} : vector<2x256xi32>
    %c128_i32 = arith.constant 128 : i32
    %6 = vector.broadcast %c128_i32 : i32 to vector<2x256xi32>
    %7 = arith.cmpi sge, %5, %6 : vector<2x256xi32>
    %c192_i32 = arith.constant 192 : i32
    %8 = vector.broadcast %c192_i32 : i32 to vector<2x256xi32>
    %9 = arith.cmpi slt, %5, %8 : vector<2x256xi32>
    %10 = arith.andi %7, %9 : vector<2x256xi1>
    %c0_4 = arith.constant 0 : index
    %c0_5 = arith.constant 0 : index
    %11 = vector.load %arg5[%c0_4, %c0_5] : memref<2x64xbf16, #tpu.memory_space<vmem>>, vector<2x64xbf16>
    %c0_6 = arith.constant 0 : index
    %c0_7 = arith.constant 0 : index
    %12 = vector.load %arg6[%c0_6, %c0_7] : memref<2x64xf32, #tpu.memory_space<vmem>>, vector<2x64xf32>
    %c0_i32_8 = arith.constant 0 : i32
    %13 = arith.index_cast %c0_i32_8 : i32 to index
    %c0_9 = arith.constant 0 : index
    %c0_10 = arith.constant 0 : index
    %14 = vector.load %arg1[%13, %c0_9, %c0_10] : memref<8x2x256xbf16, #tpu.memory_space<vmem>>, vector<1x2x256xbf16>
    %15 = vector.shape_cast %14 : vector<1x2x256xbf16> to vector<2x256xbf16>
    %16 = arith.extf %15 : vector<2x256xbf16> to vector<2x256xf32>
    %cst = arith.constant dense<0.000000e+00> : vector<2x256xf32>
    %17 = tpu.matmul %11, %3, %cst {dimension_numbers = #tpu.dot_dimension_numbers<[1], [0], [0], [1], [0, 0, 1, 1], [], []>} : vector<2x64xbf16>, vector<64x256xbf16>, vector<2x256xf32> -> vector<2x256xf32>
    %18 = arith.addf %16, %17 : vector<2x256xf32>
    %19 = vector.broadcast %4 : vector<1x256xf32> to vector<2x256xf32>
    %20 = arith.addf %18, %19 : vector<2x256xf32>
    %21 = arith.negf %20 : vector<2x256xf32>
    %22 = math.exp %21 : vector<2x256xf32>
    %cst_11 = arith.constant 1.000000e+00 : f32
    %23 = vector.broadcast %cst_11 : f32 to vector<2x256xf32>
    %24 = arith.addf %23, %22 : vector<2x256xf32>
    %25 = arith.divf %23, %24 : vector<2x256xf32>
    %26 = math.tanh %20 : vector<2x256xf32>
    %27 = arith.select %10, %26, %25 : vector<2x256xi1>, vector<2x256xf32>
    %28 = vector.extract_strided_slice %27 {offsets = [0, 0], sizes = [2, 64], strides = [1, 1]} : vector<2x256xf32> to vector<2x64xf32>
    %29 = vector.extract_strided_slice %27 {offsets = [0, 64], sizes = [2, 64], strides = [1, 1]} : vector<2x256xf32> to vector<2x64xf32>
    %30 = vector.extract_strided_slice %27 {offsets = [0, 128], sizes = [2, 64], strides = [1, 1]} : vector<2x256xf32> to vector<2x64xf32>
    %31 = vector.extract_strided_slice %27 {offsets = [0, 192], sizes = [2, 64], strides = [1, 1]} : vector<2x256xf32> to vector<2x64xf32>
    %32 = arith.mulf %29, %12 : vector<2x64xf32>
    %33 = arith.mulf %28, %30 : vector<2x64xf32>
    %34 = arith.addf %32, %33 : vector<2x64xf32>
    %35 = math.tanh %34 : vector<2x64xf32>
    %36 = arith.mulf %31, %35 : vector<2x64xf32>
    %37 = arith.truncf %36 : vector<2x64xf32> to vector<2x64xbf16>
    %c1_i32 = arith.constant 1 : i32
    %38 = arith.index_cast %c1_i32 : i32 to index
    %c0_12 = arith.constant 0 : index
    %c0_13 = arith.constant 0 : index
    %39 = vector.load %arg1[%38, %c0_12, %c0_13] : memref<8x2x256xbf16, #tpu.memory_space<vmem>>, vector<1x2x256xbf16>
    %40 = vector.shape_cast %39 : vector<1x2x256xbf16> to vector<2x256xbf16>
    %41 = arith.extf %40 : vector<2x256xbf16> to vector<2x256xf32>
    %cst_14 = arith.constant dense<0.000000e+00> : vector<2x256xf32>
    %42 = tpu.matmul %37, %3, %cst_14 {dimension_numbers = #tpu.dot_dimension_numbers<[1], [0], [0], [1], [0, 0, 1, 1], [], []>} : vector<2x64xbf16>, vector<64x256xbf16>, vector<2x256xf32> -> vector<2x256xf32>
    %43 = arith.addf %41, %42 : vector<2x256xf32>
    %44 = vector.broadcast %4 : vector<1x256xf32> to vector<2x256xf32>
    %45 = arith.addf %43, %44 : vector<2x256xf32>
    %46 = arith.negf %45 : vector<2x256xf32>
    %47 = math.exp %46 : vector<2x256xf32>
    %cst_15 = arith.constant 1.000000e+00 : f32
    %48 = vector.broadcast %cst_15 : f32 to vector<2x256xf32>
    %49 = arith.addf %48, %47 : vector<2x256xf32>
    %50 = arith.divf %48, %49 : vector<2x256xf32>
    %51 = math.tanh %45 : vector<2x256xf32>
    %52 = arith.select %10, %51, %50 : vector<2x256xi1>, vector<2x256xf32>
    %53 = vector.extract_strided_slice %52 {offsets = [0, 0], sizes = [2, 64], strides = [1, 1]} : vector<2x256xf32> to vector<2x64xf32>
    %54 = vector.extract_strided_slice %52 {offsets = [0, 64], sizes = [2, 64], strides = [1, 1]} : vector<2x256xf32> to vector<2x64xf32>
    %55 = vector.extract_strided_slice %52 {offsets = [0, 128], sizes = [2, 64], strides = [1, 1]} : vector<2x256xf32> to vector<2x64xf32>
    %56 = vector.extract_strided_slice %52 {offsets = [0, 192], sizes = [2, 64], strides = [1, 1]} : vector<2x256xf32> to vector<2x64xf32>
    %57 = arith.mulf %54, %34 : vector<2x64xf32>
    %58 = arith.mulf %53, %55 : vector<2x64xf32>
    %59 = arith.addf %57, %58 : vector<2x64xf32>
    %60 = math.tanh %59 : vector<2x64xf32>
    %61 = arith.mulf %56, %60 : vector<2x64xf32>
    %62 = arith.truncf %61 : vector<2x64xf32> to vector<2x64xbf16>
    %c2_i32 = arith.constant 2 : i32
    %63 = arith.index_cast %c2_i32 : i32 to index
    %c0_16 = arith.constant 0 : index
    %c0_17 = arith.constant 0 : index
    %64 = vector.load %arg1[%63, %c0_16, %c0_17] : memref<8x2x256xbf16, #tpu.memory_space<vmem>>, vector<1x2x256xbf16>
    %65 = vector.shape_cast %64 : vector<1x2x256xbf16> to vector<2x256xbf16>
    %66 = arith.extf %65 : vector<2x256xbf16> to vector<2x256xf32>
    %cst_18 = arith.constant dense<0.000000e+00> : vector<2x256xf32>
    %67 = tpu.matmul %62, %3, %cst_18 {dimension_numbers = #tpu.dot_dimension_numbers<[1], [0], [0], [1], [0, 0, 1, 1], [], []>} : vector<2x64xbf16>, vector<64x256xbf16>, vector<2x256xf32> -> vector<2x256xf32>
    %68 = arith.addf %66, %67 : vector<2x256xf32>
    %69 = vector.broadcast %4 : vector<1x256xf32> to vector<2x256xf32>
    %70 = arith.addf %68, %69 : vector<2x256xf32>
    %71 = arith.negf %70 : vector<2x256xf32>
    %72 = math.exp %71 : vector<2x256xf32>
    %cst_19 = arith.constant 1.000000e+00 : f32
    %73 = vector.broadcast %cst_19 : f32 to vector<2x256xf32>
    %74 = arith.addf %73, %72 : vector<2x256xf32>
    %75 = arith.divf %73, %74 : vector<2x256xf32>
    %76 = math.tanh %70 : vector<2x256xf32>
    %77 = arith.select %10, %76, %75 : vector<2x256xi1>, vector<2x256xf32>
    %78 = vector.extract_strided_slice %77 {offsets = [0, 0], sizes = [2, 64], strides = [1, 1]} : vector<2x256xf32> to vector<2x64xf32>
    %79 = vector.extract_strided_slice %77 {offsets = [0, 64], sizes = [2, 64], strides = [1, 1]} : vector<2x256xf32> to vector<2x64xf32>
    %80 = vector.extract_strided_slice %77 {offsets = [0, 128], sizes = [2, 64], strides = [1, 1]} : vector<2x256xf32> to vector<2x64xf32>
    %81 = vector.extract_strided_slice %77 {offsets = [0, 192], sizes = [2, 64], strides = [1, 1]} : vector<2x256xf32> to vector<2x64xf32>
    %82 = arith.mulf %79, %59 : vector<2x64xf32>
    %83 = arith.mulf %78, %80 : vector<2x64xf32>
    %84 = arith.addf %82, %83 : vector<2x64xf32>
    %85 = math.tanh %84 : vector<2x64xf32>
    %86 = arith.mulf %81, %85 : vector<2x64xf32>
    %87 = arith.truncf %86 : vector<2x64xf32> to vector<2x64xbf16>
    %c3_i32 = arith.constant 3 : i32
    %88 = arith.index_cast %c3_i32 : i32 to index
    %c0_20 = arith.constant 0 : index
    %c0_21 = arith.constant 0 : index
    %89 = vector.load %arg1[%88, %c0_20, %c0_21] : memref<8x2x256xbf16, #tpu.memory_space<vmem>>, vector<1x2x256xbf16>
    %90 = vector.shape_cast %89 : vector<1x2x256xbf16> to vector<2x256xbf16>
    %91 = arith.extf %90 : vector<2x256xbf16> to vector<2x256xf32>
    %cst_22 = arith.constant dense<0.000000e+00> : vector<2x256xf32>
    %92 = tpu.matmul %87, %3, %cst_22 {dimension_numbers = #tpu.dot_dimension_numbers<[1], [0], [0], [1], [0, 0, 1, 1], [], []>} : vector<2x64xbf16>, vector<64x256xbf16>, vector<2x256xf32> -> vector<2x256xf32>
    %93 = arith.addf %91, %92 : vector<2x256xf32>
    %94 = vector.broadcast %4 : vector<1x256xf32> to vector<2x256xf32>
    %95 = arith.addf %93, %94 : vector<2x256xf32>
    %96 = arith.negf %95 : vector<2x256xf32>
    %97 = math.exp %96 : vector<2x256xf32>
    %cst_23 = arith.constant 1.000000e+00 : f32
    %98 = vector.broadcast %cst_23 : f32 to vector<2x256xf32>
    %99 = arith.addf %98, %97 : vector<2x256xf32>
    %100 = arith.divf %98, %99 : vector<2x256xf32>
    %101 = math.tanh %95 : vector<2x256xf32>
    %102 = arith.select %10, %101, %100 : vector<2x256xi1>, vector<2x256xf32>
    %103 = vector.extract_strided_slice %102 {offsets = [0, 0], sizes = [2, 64], strides = [1, 1]} : vector<2x256xf32> to vector<2x64xf32>
    %104 = vector.extract_strided_slice %102 {offsets = [0, 64], sizes = [2, 64], strides = [1, 1]} : vector<2x256xf32> to vector<2x64xf32>
    %105 = vector.extract_strided_slice %102 {offsets = [0, 128], sizes = [2, 64], strides = [1, 1]} : vector<2x256xf32> to vector<2x64xf32>
    %106 = vector.extract_strided_slice %102 {offsets = [0, 192], sizes = [2, 64], strides = [1, 1]} : vector<2x256xf32> to vector<2x64xf32>
    %107 = arith.mulf %104, %84 : vector<2x64xf32>
    %108 = arith.mulf %103, %105 : vector<2x64xf32>
    %109 = arith.addf %107, %108 : vector<2x64xf32>
    %110 = math.tanh %109 : vector<2x64xf32>
    %111 = arith.mulf %106, %110 : vector<2x64xf32>
    %112 = arith.truncf %111 : vector<2x64xf32> to vector<2x64xbf16>
    %c4_i32 = arith.constant 4 : i32
    %113 = arith.index_cast %c4_i32 : i32 to index
    %c0_24 = arith.constant 0 : index
    %c0_25 = arith.constant 0 : index
    %114 = vector.load %arg1[%113, %c0_24, %c0_25] : memref<8x2x256xbf16, #tpu.memory_space<vmem>>, vector<1x2x256xbf16>
    %115 = vector.shape_cast %114 : vector<1x2x256xbf16> to vector<2x256xbf16>
    %116 = arith.extf %115 : vector<2x256xbf16> to vector<2x256xf32>
    %cst_26 = arith.constant dense<0.000000e+00> : vector<2x256xf32>
    %117 = tpu.matmul %112, %3, %cst_26 {dimension_numbers = #tpu.dot_dimension_numbers<[1], [0], [0], [1], [0, 0, 1, 1], [], []>} : vector<2x64xbf16>, vector<64x256xbf16>, vector<2x256xf32> -> vector<2x256xf32>
    %118 = arith.addf %116, %117 : vector<2x256xf32>
    %119 = vector.broadcast %4 : vector<1x256xf32> to vector<2x256xf32>
    %120 = arith.addf %118, %119 : vector<2x256xf32>
    %121 = arith.negf %120 : vector<2x256xf32>
    %122 = math.exp %121 : vector<2x256xf32>
    %cst_27 = arith.constant 1.000000e+00 : f32
    %123 = vector.broadcast %cst_27 : f32 to vector<2x256xf32>
    %124 = arith.addf %123, %122 : vector<2x256xf32>
    %125 = arith.divf %123, %124 : vector<2x256xf32>
    %126 = math.tanh %120 : vector<2x256xf32>
    %127 = arith.select %10, %126, %125 : vector<2x256xi1>, vector<2x256xf32>
    %128 = vector.extract_strided_slice %127 {offsets = [0, 0], sizes = [2, 64], strides = [1, 1]} : vector<2x256xf32> to vector<2x64xf32>
    %129 = vector.extract_strided_slice %127 {offsets = [0, 64], sizes = [2, 64], strides = [1, 1]} : vector<2x256xf32> to vector<2x64xf32>
    %130 = vector.extract_strided_slice %127 {offsets = [0, 128], sizes = [2, 64], strides = [1, 1]} : vector<2x256xf32> to vector<2x64xf32>
    %131 = vector.extract_strided_slice %127 {offsets = [0, 192], sizes = [2, 64], strides = [1, 1]} : vector<2x256xf32> to vector<2x64xf32>
    %132 = arith.mulf %129, %109 : vector<2x64xf32>
    %133 = arith.mulf %128, %130 : vector<2x64xf32>
    %134 = arith.addf %132, %133 : vector<2x64xf32>
    %135 = math.tanh %134 : vector<2x64xf32>
    %136 = arith.mulf %131, %135 : vector<2x64xf32>
    %137 = arith.truncf %136 : vector<2x64xf32> to vector<2x64xbf16>
    %c5_i32 = arith.constant 5 : i32
    %138 = arith.index_cast %c5_i32 : i32 to index
    %c0_28 = arith.constant 0 : index
    %c0_29 = arith.constant 0 : index
    %139 = vector.load %arg1[%138, %c0_28, %c0_29] : memref<8x2x256xbf16, #tpu.memory_space<vmem>>, vector<1x2x256xbf16>
    %140 = vector.shape_cast %139 : vector<1x2x256xbf16> to vector<2x256xbf16>
    %141 = arith.extf %140 : vector<2x256xbf16> to vector<2x256xf32>
    %cst_30 = arith.constant dense<0.000000e+00> : vector<2x256xf32>
    %142 = tpu.matmul %137, %3, %cst_30 {dimension_numbers = #tpu.dot_dimension_numbers<[1], [0], [0], [1], [0, 0, 1, 1], [], []>} : vector<2x64xbf16>, vector<64x256xbf16>, vector<2x256xf32> -> vector<2x256xf32>
    %143 = arith.addf %141, %142 : vector<2x256xf32>
    %144 = vector.broadcast %4 : vector<1x256xf32> to vector<2x256xf32>
    %145 = arith.addf %143, %144 : vector<2x256xf32>
    %146 = arith.negf %145 : vector<2x256xf32>
    %147 = math.exp %146 : vector<2x256xf32>
    %cst_31 = arith.constant 1.000000e+00 : f32
    %148 = vector.broadcast %cst_31 : f32 to vector<2x256xf32>
    %149 = arith.addf %148, %147 : vector<2x256xf32>
    %150 = arith.divf %148, %149 : vector<2x256xf32>
    %151 = math.tanh %145 : vector<2x256xf32>
    %152 = arith.select %10, %151, %150 : vector<2x256xi1>, vector<2x256xf32>
    %153 = vector.extract_strided_slice %152 {offsets = [0, 0], sizes = [2, 64], strides = [1, 1]} : vector<2x256xf32> to vector<2x64xf32>
    %154 = vector.extract_strided_slice %152 {offsets = [0, 64], sizes = [2, 64], strides = [1, 1]} : vector<2x256xf32> to vector<2x64xf32>
    %155 = vector.extract_strided_slice %152 {offsets = [0, 128], sizes = [2, 64], strides = [1, 1]} : vector<2x256xf32> to vector<2x64xf32>
    %156 = vector.extract_strided_slice %152 {offsets = [0, 192], sizes = [2, 64], strides = [1, 1]} : vector<2x256xf32> to vector<2x64xf32>
    %157 = arith.mulf %154, %134 : vector<2x64xf32>
    %158 = arith.mulf %153, %155 : vector<2x64xf32>
    %159 = arith.addf %157, %158 : vector<2x64xf32>
    %160 = math.tanh %159 : vector<2x64xf32>
    %161 = arith.mulf %156, %160 : vector<2x64xf32>
    %162 = arith.truncf %161 : vector<2x64xf32> to vector<2x64xbf16>
    %c6_i32 = arith.constant 6 : i32
    %163 = arith.index_cast %c6_i32 : i32 to index
    %c0_32 = arith.constant 0 : index
    %c0_33 = arith.constant 0 : index
    %164 = vector.load %arg1[%163, %c0_32, %c0_33] : memref<8x2x256xbf16, #tpu.memory_space<vmem>>, vector<1x2x256xbf16>
    %165 = vector.shape_cast %164 : vector<1x2x256xbf16> to vector<2x256xbf16>
    %166 = arith.extf %165 : vector<2x256xbf16> to vector<2x256xf32>
    %cst_34 = arith.constant dense<0.000000e+00> : vector<2x256xf32>
    %167 = tpu.matmul %162, %3, %cst_34 {dimension_numbers = #tpu.dot_dimension_numbers<[1], [0], [0], [1], [0, 0, 1, 1], [], []>} : vector<2x64xbf16>, vector<64x256xbf16>, vector<2x256xf32> -> vector<2x256xf32>
    %168 = arith.addf %166, %167 : vector<2x256xf32>
    %169 = vector.broadcast %4 : vector<1x256xf32> to vector<2x256xf32>
    %170 = arith.addf %168, %169 : vector<2x256xf32>
    %171 = arith.negf %170 : vector<2x256xf32>
    %172 = math.exp %171 : vector<2x256xf32>
    %cst_35 = arith.constant 1.000000e+00 : f32
    %173 = vector.broadcast %cst_35 : f32 to vector<2x256xf32>
    %174 = arith.addf %173, %172 : vector<2x256xf32>
    %175 = arith.divf %173, %174 : vector<2x256xf32>
    %176 = math.tanh %170 : vector<2x256xf32>
    %177 = arith.select %10, %176, %175 : vector<2x256xi1>, vector<2x256xf32>
    %178 = vector.extract_strided_slice %177 {offsets = [0, 0], sizes = [2, 64], strides = [1, 1]} : vector<2x256xf32> to vector<2x64xf32>
    %179 = vector.extract_strided_slice %177 {offsets = [0, 64], sizes = [2, 64], strides = [1, 1]} : vector<2x256xf32> to vector<2x64xf32>
    %180 = vector.extract_strided_slice %177 {offsets = [0, 128], sizes = [2, 64], strides = [1, 1]} : vector<2x256xf32> to vector<2x64xf32>
    %181 = vector.extract_strided_slice %177 {offsets = [0, 192], sizes = [2, 64], strides = [1, 1]} : vector<2x256xf32> to vector<2x64xf32>
    %182 = arith.mulf %179, %159 : vector<2x64xf32>
    %183 = arith.mulf %178, %180 : vector<2x64xf32>
    %184 = arith.addf %182, %183 : vector<2x64xf32>
    %185 = math.tanh %184 : vector<2x64xf32>
    %186 = arith.mulf %181, %185 : vector<2x64xf32>
    %187 = arith.truncf %186 : vector<2x64xf32> to vector<2x64xbf16>
    %c7_i32 = arith.constant 7 : i32
    %188 = arith.index_cast %c7_i32 : i32 to index
    %c0_36 = arith.constant 0 : index
    %c0_37 = arith.constant 0 : index
    %189 = vector.load %arg1[%188, %c0_36, %c0_37] : memref<8x2x256xbf16, #tpu.memory_space<vmem>>, vector<1x2x256xbf16>
    %190 = vector.shape_cast %189 : vector<1x2x256xbf16> to vector<2x256xbf16>
    %191 = arith.extf %190 : vector<2x256xbf16> to vector<2x256xf32>
    %cst_38 = arith.constant dense<0.000000e+00> : vector<2x256xf32>
    %192 = tpu.matmul %187, %3, %cst_38 {dimension_numbers = #tpu.dot_dimension_numbers<[1], [0], [0], [1], [0, 0, 1, 1], [], []>} : vector<2x64xbf16>, vector<64x256xbf16>, vector<2x256xf32> -> vector<2x256xf32>
    %193 = arith.addf %191, %192 : vector<2x256xf32>
    %194 = vector.broadcast %4 : vector<1x256xf32> to vector<2x256xf32>
    %195 = arith.addf %193, %194 : vector<2x256xf32>
    %196 = arith.negf %195 : vector<2x256xf32>
    %197 = math.exp %196 : vector<2x256xf32>
    %cst_39 = arith.constant 1.000000e+00 : f32
    %198 = vector.broadcast %cst_39 : f32 to vector<2x256xf32>
    %199 = arith.addf %198, %197 : vector<2x256xf32>
    %200 = arith.divf %198, %199 : vector<2x256xf32>
    %201 = math.tanh %195 : vector<2x256xf32>
    %202 = arith.select %10, %201, %200 : vector<2x256xi1>, vector<2x256xf32>
    %203 = vector.extract_strided_slice %202 {offsets = [0, 0], sizes = [2, 64], strides = [1, 1]} : vector<2x256xf32> to vector<2x64xf32>
    %204 = vector.extract_strided_slice %202 {offsets = [0, 64], sizes = [2, 64], strides = [1, 1]} : vector<2x256xf32> to vector<2x64xf32>
    %205 = vector.extract_strided_slice %202 {offsets = [0, 128], sizes = [2, 64], strides = [1, 1]} : vector<2x256xf32> to vector<2x64xf32>
    %206 = vector.extract_strided_slice %202 {offsets = [0, 192], sizes = [2, 64], strides = [1, 1]} : vector<2x256xf32> to vector<2x64xf32>
    %207 = arith.mulf %204, %184 : vector<2x64xf32>
    %208 = arith.mulf %203, %205 : vector<2x64xf32>
    %209 = arith.addf %207, %208 : vector<2x64xf32>
    %210 = math.tanh %209 : vector<2x64xf32>
    %211 = arith.mulf %206, %210 : vector<2x64xf32>
    %212 = arith.truncf %211 : vector<2x64xf32> to vector<2x64xbf16>
    %c8_i32 = arith.constant 8 : i32
    %c0_40 = arith.constant 0 : index
    %c0_41 = arith.constant 0 : index
    %213 = vector.load %arg5[%c0_40, %c0_41] : memref<2x64xbf16, #tpu.memory_space<vmem>>, vector<2x64xbf16>
    tpu.vector_store %arg5[%c0_40, %c0_41], %212 {strides = array<i32>} : memref<2x64xbf16, #tpu.memory_space<vmem>>, vector<2x64xbf16>,
    %c0_42 = arith.constant 0 : index
    %c0_43 = arith.constant 0 : index
    %214 = vector.load %arg6[%c0_42, %c0_43] : memref<2x64xf32, #tpu.memory_space<vmem>>, vector<2x64xf32>
    tpu.vector_store %arg6[%c0_42, %c0_43], %209 {strides = array<i32>} : memref<2x64xf32, #tpu.memory_space<vmem>>, vector<2x64xf32>,
    %c0_i32_44 = arith.constant 0 : i32
    %215 = arith.cmpi eq, %arg0, %c0_i32_44 : i32
    %216 = arith.extui %215 : i1 to i32
    %c0_i32_45 = arith.constant 0 : i32
    %217 = arith.cmpi ne, %216, %c0_i32_45 : i32
    scf.if %217 {
      %218 = arith.extf %212 : vector<2x64xbf16> to vector<2x64xf32>
      %c0_46 = arith.constant 0 : index
      %c0_47 = arith.constant 0 : index
      %219 = vector.load %arg4[%c0_46, %c0_47] : memref<2x64xf32, #tpu.memory_space<vmem>>, vector<2x64xf32>
      tpu.vector_store %arg4[%c0_46, %c0_47], %218 {strides = array<i32>} : memref<2x64xf32, #tpu.memory_space<vmem>>, vector<2x64xf32>,
    } else {
    }
    return
  }
  func.func @transform_0(%arg0: i32) -> (i32, i32, i32) {
    %c0_i32 = arith.constant 0 : i32
    %c0_i32_0 = arith.constant 0 : i32
    %c0_i32_1 = arith.constant 0 : i32
    return %arg0, %c0_i32, %c0_i32_0 : i32, i32, i32
  }
  func.func @transform_1(%arg0: i32) -> (i32, i32) {
    %c0_i32 = arith.constant 0 : i32
    %c0_i32_0 = arith.constant 0 : i32
    %c0_i32_1 = arith.constant 0 : i32
    return %c0_i32, %c0_i32_0 : i32, i32
  }
  func.func @transform_2(%arg0: i32) -> (i32, i32) {
    %c0_i32 = arith.constant 0 : i32
    %c0_i32_0 = arith.constant 0 : i32
    %c0_i32_1 = arith.constant 0 : i32
    return %c0_i32, %c0_i32_0 : i32, i32
  }
  func.func @transform_3(%arg0: i32) -> (i32, i32) {
    %c0_i32 = arith.constant 0 : i32
    %c0_i32_0 = arith.constant 0 : i32
    %c0_i32_1 = arith.constant 0 : i32
    return %c0_i32, %c0_i32_0 : i32, i32
  }
}

</mosaic_0001>

<llo_original>
// kernel: squeeze.0
$region0: #{squeeze.0}
  %s0 = inlined_call_operand.vmem [shape: bf16[1,8,2,128], index: 0, kind: input, shape index: {}]
  %s1 = inlined_call_operand.vmem [shape: bf16[8,2,4,1,32], index: 1, kind: output, shape index: {}]
  $region1: #{squeeze.0} parent=0
    #allocation0 [shape = 'u8[65536]{0}', space=vmem, size = 0x10000, scoped, tag = 'scoped mem for output reshape']
    #allocation1 [shape = 'u8[8192]{0}', space=vmem, size = 0x2000, scoped, tag = 'scoped mem for input reshape']
    %s3 = smul.u32 4, 2
    %s4 = sshll.u32 1, %s3
    %s5 = ssub.s32 %s4, 1
    %s6 = scalar_lea.vmem %s0, 4
    %s7 = sshrl.u32 %s5, 1
    %s8 = sor.u32 %s5, %s7
    %s9 = sand.u32 %s8, 85
    %s10 = sshrl.u32 %s9, 1
    %s11 = sor.u32 %s9, %s10
    %s12 = sand.u32 51, %s11
    %s13 = sshrl.u32 %s12, 2
    %s14 = sor.u32 %s12, %s13
    %s15 = sand.u32 15, %s14
    %v16 = vld [vmem:[%s6] sm:%s15]
    %v17 = vunpack.c.l.bf16 %v16
    %v18 = vunpack.c.h.bf16 %v16
    %s19 = scalar_lea.vmem [#allocation1], 8
    %20 = vst [vmem:[%s19] sm:%s5] %v17
    %s21 = sshrl.u32 %s5, 1
    %s22 = sor.u32 %s5, %s21
    %s23 = sand.u32 %s22, 85
    %s24 = sshrl.u32 %s23, 1
    %s25 = sor.u32 %s23, %s24
    %s26 = sand.u32 51, %s25
    %s27 = sshrl.u32 %s26, 2
    %s28 = sor.u32 %s26, %s27
    %s29 = sand.u32 15, %s28
    %v30 = vld [vmem:[%s0] sm:%s29]
    %v31 = vunpack.c.l.bf16 %v30
    %v32 = vunpack.c.h.bf16 %v30
    %33 = vst [vmem:[#allocation1] sm:%s5] %v31
    %v34 = vld [vmem:[#allocation1] sm:$0xff]
    %vm35 = vcmask 261120
    %36 = vst.msk [vmem:[#allocation0] ss:$8 sm:$0xf] %vm35, %v34
    %37 = vst.msk [vmem:[#allocation0] ss:$8 sm:$0xf0] %vm35, %v34
    %s38 = scalar_lea.vmem [#allocation1], 8
    %v39 = vld [vmem:[%s38] sm:$0xff]
    %vm40 = vcmask 261120
    %s41 = scalar_lea.vmem [#allocation0], 64
    %42 = vst.msk [vmem:[%s41] ss:$8 sm:$0xf] %vm40, %v39
    %s43 = scalar_lea.vmem [#allocation0], 64
    %44 = vst.msk [vmem:[%s43] ss:$8 sm:$0xf0] %vm40, %v39
    %v45 = vld [vmem:[#allocation1] sm:$0xff]
    %46 = vrot.lane.b32.xlu0 %v45, 96
    %v47 = vpop.permute.xlu0 %46
    %vm48 = vcmask 261120
    %s49 = scalar_lea.vmem [#allocation0], 1
    %50 = vst.msk [vmem:[%s49] ss:$8 sm:$0xf] %vm48, %v47
    %s51 = scalar_lea.vmem [#allocation0], 1
    %52 = vst.msk [vmem:[%s51] ss:$8 sm:$0xf0] %vm48, %v47
    %s53 = scalar_lea.vmem [#allocation1], 8
    %v54 = vld [vmem:[%s53] sm:$0xff]
    %55 = vrot.lane.b32.xlu0 %v54, 96
    %v56 = vpop.permute.xlu0 %55
    %vm57 = vcmask 261120
    %s58 = scalar_lea.vmem [#allocation0], 65
    %59 = vst.msk [vmem:[%s58] ss:$8 sm:$0xf] %vm57, %v56
    %s60 = scalar_lea.vmem [#allocation0], 65
    %61 = vst.msk [vmem:[%s60] ss:$8 sm:$0xf0] %vm57, %v56
    %v62 = vld [vmem:[#allocation1] sm:$0xff]
    %63 = vrot.lane.b32.xlu0 %v62, 64
    %v64 = vpop.permute.xlu0 %63
    %vm65 = vcmask 261120
    %s66 = scalar_lea.vmem [#allocation0], 2
    %67 = vst.msk [vmem:[%s66] ss:$8 sm:$0xf] %vm65, %v64
    %s68 = scalar_lea.vmem [#allocation0], 2
    %69 = vst.msk [vmem:[%s68] ss:$8 sm:$0xf0] %vm65, %v64
    %s70 = scalar_lea.vmem [#allocation1], 8
    %v71 = vld [vmem:[%s70] sm:$0xff]
    %72 = vrot.lane.b32.xlu0 %v71, 64
    %v73 = vpop.permute.xlu0 %72
    %vm74 = vcmask 261120
    %s75 = scalar_lea.vmem [#allocation0], 66
    %76 = vst.msk [vmem:[%s75] ss:$8 sm:$0xf] %vm74, %v73
    %s77 = scalar_lea.vmem [#allocation0], 66
    %78 = vst.msk [vmem:[%s77] ss:$8 sm:$0xf0] %vm74, %v73
    %v79 = vld [vmem:[#allocation1] sm:$0xff]
    %80 = vrot.lane.b32.xlu0 %v79, 32
    %v81 = vpop.permute.xlu0 %80
    %vm82 = vcmask 261120
    %s83 = scalar_lea.vmem [#allocation0], 3
    %84 = vst.msk [vmem:[%s83] ss:$8 sm:$0xf] %vm82, %v81
    %s85 = scalar_lea.vmem [#allocation0], 3
    %86 = vst.msk [vmem:[%s85] ss:$8 sm:$0xf0] %vm82, %v81
    %s87 = scalar_lea.vmem [#allocation1], 8
    %v88 = vld [vmem:[%s87] sm:$0xff]
    %89 = vrot.lane.b32.xlu0 %v88, 32
    %v90 = vpop.permute.xlu0 %89
    %vm91 = vcmask 261120
    %s92 = scalar_lea.vmem [#allocation0], 67
    %93 = vst.msk [vmem:[%s92] ss:$8 sm:$0xf] %vm91, %v90
    %s94 = scalar_lea.vmem [#allocation0], 67
    %95 = vst.msk [vmem:[%s94] ss:$8 sm:$0xf0] %vm91, %v90
    %s97 = smul.u32 2, 2
    %s98 = sshll.u32 1, %s97
    %s99 = ssub.s32 %s98, 1
    %s100 = sshrl.u32 %s97, 1
    %v101 = vld [vmem:[#allocation0] sm:%s99]
    %v102 = vpack.c.bf16 0.0, %v101
    %s103 = sshll.u32 1, %s100
    %s104 = ssub.s32 %s103, 1
    %105 = vst [vmem:[%s1] sm:%s104] %v102
    %s106 = scalar_lea.vmem [#allocation0], 8
    %v107 = vld [vmem:[%s106] sm:%s99]
    %v108 = vpack.c.bf16 0.0, %v107
    %s109 = sshll.u32 1, %s100
    %s110 = ssub.s32 %s109, 1
    %s111 = scalar_lea.vmem %s1, 2
    %112 = vst [vmem:[%s111] sm:%s110] %v108
    %s113 = scalar_lea.vmem [#allocation0], 16
    %v114 = vld [vmem:[%s113] sm:%s99]
    %v115 = vpack.c.bf16 0.0, %v114
    %s116 = sshll.u32 1, %s100
    %s117 = ssub.s32 %s116, 1
    %s118 = smul.addr 2, 2
    %s119 = scalar_lea.vmem %s1, %s118
    %120 = vst [vmem:[%s119] sm:%s117] %v115
    %s121 = scalar_lea.vmem [#allocation0], 24
    %v122 = vld [vmem:[%s121] sm:%s99]
    %v123 = vpack.c.bf16 0.0, %v122
    %s124 = sshll.u32 1, %s100
    %s125 = ssub.s32 %s124, 1
    %s126 = smul.addr 2, 3
    %s127 = scalar_lea.vmem %s1, %s126
    %128 = vst [vmem:[%s127] sm:%s125] %v123
    %s129 = scalar_lea.vmem [#allocation0], 32
    %v130 = vld [vmem:[%s129] sm:%s99]
    %v131 = vpack.c.bf16 0.0, %v130
    %s132 = sshll.u32 1, %s100
    %s133 = ssub.s32 %s132, 1
    %s134 = smul.addr 2, 4
    %s135 = scalar_lea.vmem %s1, %s134
    %136 = vst [vmem:[%s135] sm:%s133] %v131
    %s137 = scalar_lea.vmem [#allocation0], 40
    %v138 = vld [vmem:[%s137] sm:%s99]
    %v139 = vpack.c.bf16 0.0, %v138
    %s140 = sshll.u32 1, %s100
    %s141 = ssub.s32 %s140, 1
    %s142 = smul.addr 2, 5
    %s143 = scalar_lea.vmem %s1, %s142
    %144 = vst [vmem:[%s143] sm:%s141] %v139
    %s145 = scalar_lea.vmem [#allocation0], 48
    %v146 = vld [vmem:[%s145] sm:%s99]
    %v147 = vpack.c.bf16 0.0, %v146
    %s148 = sshll.u32 1, %s100
    %s149 = ssub.s32 %s148, 1
    %s150 = smul.addr 2, 6
    %s151 = scalar_lea.vmem %s1, %s150
    %152 = vst [vmem:[%s151] sm:%s149] %v147
    %s153 = scalar_lea.vmem [#allocation0], 56
    %v154 = vld [vmem:[%s153] sm:%s99]
    %v155 = vpack.c.bf16 0.0, %v154
    %s156 = sshll.u32 1, %s100
    %s157 = ssub.s32 %s156, 1
    %s158 = smul.addr 2, 7
    %s159 = scalar_lea.vmem %s1, %s158
    %160 = vst [vmem:[%s159] sm:%s157] %v155
    %s161 = scalar_lea.vmem [#allocation0], 64
    %v162 = vld [vmem:[%s161] sm:%s99]
    %v163 = vpack.c.bf16 0.0, %v162
    %s164 = sshll.u32 1, %s100
    %s165 = ssub.s32 %s164, 1
    %s166 = smul.addr 2, 8
    %s167 = scalar_lea.vmem %s1, %s166
    %168 = vst [vmem:[%s167] sm:%s165] %v163
    %s169 = scalar_lea.vmem [#allocation0], 72
    %v170 = vld [vmem:[%s169] sm:%s99]
    %v171 = vpack.c.bf16 0.0, %v170
    %s172 = sshll.u32 1, %s100
    %s173 = ssub.s32 %s172, 1
    %s174 = smul.addr 2, 9
    %s175 = scalar_lea.vmem %s1, %s174
    %176 = vst [vmem:[%s175] sm:%s173] %v171
    %s177 = scalar_lea.vmem [#allocation0], 80
    %v178 = vld [vmem:[%s177] sm:%s99]
    %v179 = vpack.c.bf16 0.0, %v178
    %s180 = sshll.u32 1, %s100
    %s181 = ssub.s32 %s180, 1
    %s182 = smul.addr 2, 10
    %s183 = scalar_lea.vmem %s1, %s182
    %184 = vst [vmem:[%s183] sm:%s181] %v179
    %s185 = scalar_lea.vmem [#allocation0], 88
    %v186 = vld [vmem:[%s185] sm:%s99]
    %v187 = vpack.c.bf16 0.0, %v186
    %s188 = sshll.u32 1, %s100
    %s189 = ssub.s32 %s188, 1
    %s190 = smul.addr 2, 11
    %s191 = scalar_lea.vmem %s1, %s190
    %192 = vst [vmem:[%s191] sm:%s189] %v187
    %s193 = scalar_lea.vmem [#allocation0], 96
    %v194 = vld [vmem:[%s193] sm:%s99]
    %v195 = vpack.c.bf16 0.0, %v194
    %s196 = sshll.u32 1, %s100
    %s197 = ssub.s32 %s196, 1
    %s198 = smul.addr 2, 12
    %s199 = scalar_lea.vmem %s1, %s198
    %200 = vst [vmem:[%s199] sm:%s197] %v195
    %s201 = scalar_lea.vmem [#allocation0], 104
    %v202 = vld [vmem:[%s201] sm:%s99]
    %v203 = vpack.c.bf16 0.0, %v202
    %s204 = sshll.u32 1, %s100
    %s205 = ssub.s32 %s204, 1
    %s206 = smul.addr 2, 13
    %s207 = scalar_lea.vmem %s1, %s206
    %208 = vst [vmem:[%s207] sm:%s205] %v203
    %s209 = scalar_lea.vmem [#allocation0], 112
    %v210 = vld [vmem:[%s209] sm:%s99]
    %v211 = vpack.c.bf16 0.0, %v210
    %s212 = sshll.u32 1, %s100
    %s213 = ssub.s32 %s212, 1
    %s214 = smul.addr 2, 14
    %s215 = scalar_lea.vmem %s1, %s214
    %216 = vst [vmem:[%s215] sm:%s213] %v211
    %s217 = scalar_lea.vmem [#allocation0], 120
    %v218 = vld [vmem:[%s217] sm:%s99]
    %v219 = vpack.c.bf16 0.0, %v218
    %s220 = sshll.u32 1, %s100
    %s221 = ssub.s32 %s220, 1
    %s222 = smul.addr 2, 15
    %s223 = scalar_lea.vmem %s1, %s222
    %224 = vst [vmem:[%s223] sm:%s221] %v219

// kernel: encoder_forward.1
$region0: #{encoder_forward.1}
  #allocation0 [shape = 'u32[]', space=smem, size = 0x4, offset = 0x4, fixed_abs, tag = 'smem constant byte address 0x4 - core index']
  #allocation1 [shape = 'u32[144,128]{1,0:T(1,128)}', space=vmem, size = 0x12000, scoped, tag = 'internal scratch']
  #allocation2 [shape = 'bf16[2,64]{1,0:T(2,128)(2,1)}', space=vmem, size = 0x200, scoped, tag = 'scratch operand']
  #allocation3 [shape = 'f32[2,64]{1,0:T(2,128)}', space=vmem, size = 0x400, scoped, tag = 'scratch operand']
  %s0 = inlined_call_operand.vmem [shape: bf16[8,2,256], index: 0, kind: input, shape index: {}]
  %s1 = inlined_call_operand.vmem [shape: bf16[64,256], index: 1, kind: input, shape index: {}]
  %s2 = inlined_call_operand.vmem [shape: f32[1,256], index: 2, kind: input, shape index: {}]
  %s3 = inlined_call_operand.hbm [shape: f32[2,64], index: 3, kind: output, shape index: {}]
  %s4 = sld [smem:[#allocation0]]
  $region30: #{encoder_forward.1} parent=0
    _
  %s6 = ssub.s32 1, %s4
  %s7 = scalar_select 0, %s6, %s4
  $region1: #{encoder_forward.1} parent=0
    #allocation4 [shape = 'u8[1024]{0}', space=vmem, size = 0x400, scoped, tag = 'output window, operand 0, single buffered']
    #allocation5 [shape = 's32[1]{0}', space=sflag, size = 0x4, scoped, tag = 'scoped memory for encoder_forward.1']
    %8 = vsyncpa [#allocation5], 0
    // Predicated region
    $region2: #{encoder_forward.1} parent=1 // pred_check
      _
    $region3: #{encoder_forward.1} parent=1 // pred_check_branch
      %10 = sbr.rel (0) target = $region5
    $region4: #{encoder_forward.1} parent=1 // pred_region
      _
    $region5: #{encoder_forward.1} parent=1 // pred_fallthru
      _
    // Predicated region
    $region6: #{encoder_forward.1} parent=1 // pred_check
      _
    $region7: #{encoder_forward.1} parent=1 // pred_check_branch
      %12 = sbr.rel (0) target = $region9
    $region8: #{encoder_forward.1} parent=1 // pred_region
      _
    $region9: #{encoder_forward.1} parent=1 // pred_fallthru
      _
    // Predicated region
    $region10: #{encoder_forward.1} parent=1 // pred_check
      _
    $region11: #{encoder_forward.1} parent=1 // pred_check_branch
      %14 = sbr.rel (0) target = $region13
    $region12: #{encoder_forward.1} parent=1 // pred_region
      _
    $region13: #{encoder_forward.1} parent=1 // pred_fallthru
      _
    %p16 = scmp.eq.s32.totalorder 0, 0
    // Predicated region
    $region14: #{encoder_forward.1} parent=1 // pred_check
      %p17 = pneg %p16
    $region15: #{encoder_forward.1} parent=1 // pred_check_branch
      %19 = sbr.rel (%p17) target = $region17
    $region16: #{encoder_forward.1} parent=1 // pred_region
      %vm20 = vcmask 516096
      %21 = vst.msk [vmem:[#allocation2] sm:$0x1] %vm20, 0
      %vm22 = vcmask 517120
      %23 = vst.msk [vmem:[#allocation3] sm:$0x3] %vm22, 0.0
    $region17: #{encoder_forward.1} parent=1 // pred_fallthru
      _
    %v24 = vld [vmem:[%s1] sm:$0xff]
    %v25 = vld [vmem:[%s1 + $0x8] sm:$0xff]
    %v26 = vld [vmem:[%s1 + $0x10] sm:$0xff]
    %v27 = vld [vmem:[%s1 + $0x18] sm:$0xff]
    %v28 = vld [vmem:[%s1 + $0x20] sm:$0xff]
    %v29 = vld [vmem:[%s1 + $0x28] sm:$0xff]
    %v30 = vld [vmem:[%s1 + $0x30] sm:$0xff]
    %v31 = vld [vmem:[%s1 + $0x38] sm:$0xff]
    %v32 = vld [vmem:[%s2] sm:$0x3]
    %v33 = vlaneseq
    %v34 = vand.u32 %v33, 127
    %v35 = vadd.s32 %v34, 128
    %vm36 = vcmp.ge.s32.totalorder %v34, 128
    %vm37 = vcmp.ge.s32.totalorder %v35, 128
    %vm38 = vcmp.lt.s32.totalorder %v34, 192
    %vm39 = vcmp.lt.s32.totalorder %v35, 192
    %vm40 = vmand %vm36, %vm38
    %vm41 = vmand %vm37, %vm39
    %v42 = vld [vmem:[#allocation2] sm:$0x1]
    %v43 = vld [vmem:[#allocation3] sm:$0x3]
    %v44 = vld [vmem:[%s0] sm:$0x3]
    %v45 = vunpack.c.l.bf16 %v44
    %v54 = vunpack.c.l.b16 %v24
    %v55 = vunpack.c.h.b16 %v24
    %v56 = vunpack.c.l.b16 %v25
    %v57 = vunpack.c.h.b16 %v25
    %v58 = vunpack.c.l.b16 %v26
    %v59 = vunpack.c.h.b16 %v26
    %v60 = vunpack.c.l.b16 %v27
    %v61 = vunpack.c.h.b16 %v27
    %v62 = vunpack.c.l.b16 %v28
    %v63 = vunpack.c.h.b16 %v28
    %v64 = vunpack.c.l.b16 %v29
    %v65 = vunpack.c.h.b16 %v29
    %v66 = vunpack.c.l.b16 %v30
    %v67 = vunpack.c.h.b16 %v30
    %v68 = vunpack.c.l.b16 %v31
    %v69 = vunpack.c.h.b16 %v31
    %v70 = vpack.c.b16 %v56, %v54
    %v71 = vpack.c.b16 %v57, %v55
    %v72 = vpack.c.b16 %v60, %v58
    %v73 = vpack.c.b16 %v61, %v59
    %v74 = vpack.c.b16 %v64, %v62
    %v75 = vpack.c.b16 %v65, %v63
    %v76 = vpack.c.b16 %v68, %v66
    %v77 = vpack.c.b16 %v69, %v67
    %vm86 = vcmask 523264
    %v88 = vsel %vm86, %v42, 0
    %90 = vmatprep.subr.bf16.mxu0 0
    %91 = vmatpush1.bf16.msra.mxu0 0
    %92 = vmatprep.subr.bf16.mxu0 0
    %93 = vmatpush1.bf16.msra.mxu0 0
    %94 = vmatprep.subr.bf16.mxu0 0
    %95 = vmatpush1.bf16.msra.mxu0 0
    %96 = vmatprep.subr.bf16.mxu0 0
    %97 = vmatpush1.bf16.msra.mxu0 0
    %98 = vmatprep.subr.bf16.mxu0 %v77
    %99 = vmatpush1.bf16.msra.mxu0 %v76
    %100 = vmatprep.subr.bf16.mxu0 %v75
    %101 = vmatpush1.bf16.msra.mxu0 %v74
    %102 = vmatprep.subr.bf16.mxu0 %v73
    %103 = vmatpush1.bf16.msra.mxu0 %v72
    %104 = vmatprep.subr.bf16.mxu0 %v71
    %105 = vmatpush1.bf16.msra.mxu0 %v70
    %106 = vmatprep.subr.bf16.mxu0 0
    %107 = vmatpush2.bf16.msra.mxu0 0
    %108 = vmatprep.subr.bf16.mxu0 0
    %109 = vmatpush2.bf16.msra.mxu0 0
    %110 = vmatprep.subr.bf16.mxu0 0
    %111 = vmatpush2.bf16.msra.mxu0 0
    %112 = vmatprep.subr.bf16.mxu0 0
    %113 = vmatpush2.bf16.msra.mxu0 0
    %114 = vmatprep.subr.bf16.mxu0 0
    %115 = vmatpush2.bf16.msra.mxu0 0
    %116 = vmatprep.subr.bf16.mxu0 0
    %117 = vmatpush2.bf16.msra.mxu0 0
    %118 = vmatprep.subr.bf16.mxu0 0
    %119 = vmatpush2.bf16.msra.mxu0 0
    %120 = vmatprep.subr.bf16.mxu0 0
    %121 = vmatpush2.bf16.msra.mxu0 0
    %122 = vmatprep.mubr.bf16.mxu0 0
    %123 = vmatmul.mubr.bf16.gmra.mxu0 %v88
    %v124 = vpop.f32.mrf.mxu0
    %v125 = vadd.f32 0.0, %v124
    %v126 = vpop.f32.mrf.mxu0
    %v127 = vadd.f32 0.0, %v126
    %v128 = vpop.f32.mrf.mxu0
    %v129 = vpop.f32.mrf.mxu0
    %130 = vdwg.mxu0
    %v133 = vcombine.low %v125, %v127
    %v135 = vunpack.c.l.s4 1983009808
    %v136 = vunpack.c.0.s8 %v135
    %v137 = vlaneseq
    %v138 = vshrl.u32 %v137, 7
    %v139 = vsub.s32 %v136, %v138
    %v140 = vrot.slane %v133, %v139
    %v142 = vadd.f32 %v45, %v140
    %v144 = vlaneseq
    %v145 = vshrl.u32 %v144, 7
    %v146 = vsub.s32 0, %v145
    %v147 = vrot.slane %v32, %v146
    %v148 = vlaneseq
    %v149 = vshrl.u32 %v148, 7
    %v150 = vsub.s32 1, %v149
    %v151 = vrot.slane %v32, %v150
    %v152 = vcombine.low %v147, %v151
    %v154 = vunpack.c.l.s4 1983009808
    %v155 = vunpack.c.0.s8 %v154
    %v156 = vlaneseq
    %v157 = vshrl.u32 %v156, 7
    %v158 = vsub.s32 %v155, %v157
    %v159 = vrot.slane %v152, %v158
    %v161 = vadd.f32 %v142, %v159
    %v162 = vxor.u32 %v161, 2147483648
    %v163 = vmul.f32 %v162, 1.442695
    %v164 = vpow.pop %v163
    %v165 = vadd.f32 %v164, 1.0
    %v166 = vrcp.pop %v165
    %v167 = vmul.f32 1.0, %v166
    %v168 = vtanh.pop %v161
    %v171 = vunpack.c.l.s4 1983009808
    %v172 = vunpack.c.0.s8 %v171
    %v173 = vlaneseq
    %v174 = vshrl.u32 %v173, 7
    %v175 = vsub.s32 %v172, %v174
    %v176 = vrot.slane %v168, %v175
    %v177 = vcombine.high %v176, %v176
    %v182 = vunpack.c.l.s4 1983009808
    %v183 = vunpack.c.0.s8 %v182
    %v184 = vlaneseq
    %v185 = vshrl.u32 %v184, 7
    %v186 = vsub.s32 %v183, %v185
    %v187 = vrot.slane %v167, %v186
    %v188 = vcombine.high %v187, %v187
    %v191 = vsel %vm40, %v176, %v187
    %v192 = vsel %vm41, %v177, %v188
    %194 = vrot.lane.b32.xlu0 %v43, 64
    %v195 = vpop.permute.xlu0 %194
    %v197 = vmul.f32 %v191, %v195
    %v198 = vmul.f32 %v191, %v192
    %200 = vrot.lane.b32.xlu0 %v198, 64
    %v201 = vpop.permute.xlu0 %200
    %v203 = vadd.f32 %v197, %v201
    %v204 = vtanh.pop %v203
    %v205 = vmul.f32 %v192, %v204
    %v206 = vpack.c.bf16 %v205, %v205
    %s207 = scalar_lea.vmem %s0, 2
    %v208 = vld [vmem:[%s207] sm:$0x3]
    %v209 = vunpack.c.l.bf16 %v208
    %211 = vrot.lane.b32.xlu0 %v206, 64
    %v212 = vpop.permute.xlu0 %211
    %v214 = vsel %vm86, %v212, 0
    %216 = vmatprep.subr.bf16.mxu0 0
    %217 = vmatpush1.bf16.msra.mxu0 0
    %218 = vmatprep.subr.bf16.mxu0 0
    %219 = vmatpush1.bf16.msra.mxu0 0
    %220 = vmatprep.subr.bf16.mxu0 0
    %221 = vmatpush1.bf16.msra.mxu0 0
    %222 = vmatprep.subr.bf16.mxu0 0
    %223 = vmatpush1.bf16.msra.mxu0 0
    %224 = vmatprep.subr.bf16.mxu0 %v77
    %225 = vmatpush1.bf16.msra.mxu0 %v76
    %226 = vmatprep.subr.bf16.mxu0 %v75
    %227 = vmatpush1.bf16.msra.mxu0 %v74
    %228 = vmatprep.subr.bf16.mxu0 %v73
    %229 = vmatpush1.bf16.msra.mxu0 %v72
    %230 = vmatprep.subr.bf16.mxu0 %v71
    %231 = vmatpush1.bf16.msra.mxu0 %v70
    %232 = vmatprep.subr.bf16.mxu0 0
    %233 = vmatpush2.bf16.msra.mxu0 0
    %234 = vmatprep.subr.bf16.mxu0 0
    %235 = vmatpush2.bf16.msra.mxu0 0
    %236 = vmatprep.subr.bf16.mxu0 0
    %237 = vmatpush2.bf16.msra.mxu0 0
    %238 = vmatprep.subr.bf16.mxu0 0
    %239 = vmatpush2.bf16.msra.mxu0 0
    %240 = vmatprep.subr.bf16.mxu0 0
    %241 = vmatpush2.bf16.msra.mxu0 0
    %242 = vmatprep.subr.bf16.mxu0 0
    %243 = vmatpush2.bf16.msra.mxu0 0
    %244 = vmatprep.subr.bf16.mxu0 0
    %245 = vmatpush2.bf16.msra.mxu0 0
    %246 = vmatprep.subr.bf16.mxu0 0
    %247 = vmatpush2.bf16.msra.mxu0 0
    %248 = vmatprep.mubr.bf16.mxu0 0
    %249 = vmatmul.mubr.bf16.gmra.mxu0 %v214
    %v250 = vpop.f32.mrf.mxu0
    %v251 = vadd.f32 0.0, %v250
    %v252 = vpop.f32.mrf.mxu0
    %v253 = vadd.f32 0.0, %v252
    %v254 = vpop.f32.mrf.mxu0
    %v255 = vpop.f32.mrf.mxu0
    %256 = vdwg.mxu0
    %v259 = vcombine.low %v251, %v253
    %v261 = vunpack.c.l.s4 1983009808
    %v262 = vunpack.c.0.s8 %v261
    %v263 = vlaneseq
    %v264 = vshrl.u32 %v263, 7
    %v265 = vsub.s32 %v262, %v264
    %v266 = vrot.slane %v259, %v265
    %v268 = vadd.f32 %v209, %v266
    %v269 = vadd.f32 %v268, %v159
    %v270 = vxor.u32 %v269, 2147483648
    %v271 = vmul.f32 %v270, 1.442695
    %v272 = vpow.pop %v271
    %v273 = vadd.f32 %v272, 1.0
    %v274 = vrcp.pop %v273
    %v275 = vmul.f32 1.0, %v274
    %v276 = vtanh.pop %v269
    %v279 = vunpack.c.l.s4 1983009808
    %v280 = vunpack.c.0.s8 %v279
    %v281 = vlaneseq
    %v282 = vshrl.u32 %v281, 7
    %v283 = vsub.s32 %v280, %v282
    %v284 = vrot.slane %v276, %v283
    %v285 = vcombine.high %v284, %v284
    %v290 = vunpack.c.l.s4 1983009808
    %v291 = vunpack.c.0.s8 %v290
    %v292 = vlaneseq
    %v293 = vshrl.u32 %v292, 7
    %v294 = vsub.s32 %v291, %v293
    %v295 = vrot.slane %v275, %v294
    %v296 = vcombine.high %v295, %v295
    %v299 = vsel %vm40, %v284, %v295
    %v300 = vsel %vm41, %v285, %v296
    %v301 = vmul.f32 %v299, %v203
    %v302 = vmul.f32 %v299, %v300
    %304 = vrot.lane.b32.xlu0 %v302, 64
    %v305 = vpop.permute.xlu0 %304
    %v307 = vadd.f32 %v301, %v305
    %v308 = vtanh.pop %v307
    %v309 = vmul.f32 %v300, %v308
    %v310 = vpack.c.bf16 %v309, %v309
    %s311 = scalar_lea.vmem %s0, 4
    %v312 = vld [vmem:[%s311] sm:$0x3]
    %v313 = vunpack.c.l.bf16 %v312
    %315 = vrot.lane.b32.xlu0 %v310, 64
    %v316 = vpop.permute.xlu0 %315
    %v318 = vsel %vm86, %v316, 0
    %320 = vmatprep.subr.bf16.mxu0 0
    %321 = vmatpush1.bf16.msra.mxu0 0
    %322 = vmatprep.subr.bf16.mxu0 0
    %323 = vmatpush1.bf16.msra.mxu0 0
    %324 = vmatprep.subr.bf16.mxu0 0
    %325 = vmatpush1.bf16.msra.mxu0 0
    %326 = vmatprep.subr.bf16.mxu0 0
    %327 = vmatpush1.bf16.msra.mxu0 0
    %328 = vmatprep.subr.bf16.mxu0 %v77
    %329 = vmatpush1.bf16.msra.mxu0 %v76
    %330 = vmatprep.subr.bf16.mxu0 %v75
    %331 = vmatpush1.bf16.msra.mxu0 %v74
    %332 = vmatprep.subr.bf16.mxu0 %v73
    %333 = vmatpush1.bf16.msra.mxu0 %v72
    %334 = vmatprep.subr.bf16.mxu0 %v71
    %335 = vmatpush1.bf16.msra.mxu0 %v70
    %336 = vmatprep.subr.bf16.mxu0 0
    %337 = vmatpush2.bf16.msra.mxu0 0
    %338 = vmatprep.subr.bf16.mxu0 0
    %339 = vmatpush2.bf16.msra.mxu0 0
    %340 = vmatprep.subr.bf16.mxu0 0
    %341 = vmatpush2.bf16.msra.mxu0 0
    %342 = vmatprep.subr.bf16.mxu0 0
    %343 = vmatpush2.bf16.msra.mxu0 0
    %344 = vmatprep.subr.bf16.mxu0 0
    %345 = vmatpush2.bf16.msra.mxu0 0
    %346 = vmatprep.subr.bf16.mxu0 0
    %347 = vmatpush2.bf16.msra.mxu0 0
    %348 = vmatprep.subr.bf16.mxu0 0
    %349 = vmatpush2.bf16.msra.mxu0 0
    %350 = vmatprep.subr.bf16.mxu0 0
    %351 = vmatpush2.bf16.msra.mxu0 0
    %352 = vmatprep.mubr.bf16.mxu0 0
    %353 = vmatmul.mubr.bf16.gmra.mxu0 %v318
    %v354 = vpop.f32.mrf.mxu0
    %v355 = vadd.f32 0.0, %v354
    %v356 = vpop.f32.mrf.mxu0
    %v357 = vadd.f32 0.0, %v356
    %v358 = vpop.f32.mrf.mxu0
    %v359 = vpop.f32.mrf.mxu0
    %360 = vdwg.mxu0
    %v363 = vcombine.low %v355, %v357
    %v365 = vunpack.c.l.s4 1983009808
    %v366 = vunpack.c.0.s8 %v365
    %v367 = vlaneseq
    %v368 = vshrl.u32 %v367, 7
    %v369 = vsub.s32 %v366, %v368
    %v370 = vrot.slane %v363, %v369
    %v372 = vadd.f32 %v313, %v370
    %v373 = vadd.f32 %v372, %v159
    %v374 = vxor.u32 %v373, 2147483648
    %v375 = vmul.f32 %v374, 1.442695
    %v376 = vpow.pop %v375
    %v377 = vadd.f32 %v376, 1.0
    %v378 = vrcp.pop %v377
    %v379 = vmul.f32 1.0, %v378
    %v380 = vtanh.pop %v373
    %v383 = vunpack.c.l.s4 1983009808
    %v384 = vunpack.c.0.s8 %v383
    %v385 = vlaneseq
    %v386 = vshrl.u32 %v385, 7
    %v387 = vsub.s32 %v384, %v386
    %v388 = vrot.slane %v380, %v387
    %v389 = vcombine.high %v388, %v388
    %v394 = vunpack.c.l.s4 1983009808
    %v395 = vunpack.c.0.s8 %v394
    %v396 = vlaneseq
    %v397 = vshrl.u32 %v396, 7
    %v398 = vsub.s32 %v395, %v397
    %v399 = vrot.slane %v379, %v398
    %v400 = vcombine.high %v399, %v399
    %v403 = vsel %vm40, %v388, %v399
    %v404 = vsel %vm41, %v389, %v400
    %v405 = vmul.f32 %v403, %v307
    %v406 = vmul.f32 %v403, %v404
    %408 = vrot.lane.b32.xlu0 %v406, 64
    %v409 = vpop.permute.xlu0 %408
    %v411 = vadd.f32 %v405, %v409
    %v412 = vtanh.pop %v411
    %v413 = vmul.f32 %v404, %v412
    %v414 = vpack.c.bf16 %v413, %v413
    %s415 = scalar_lea.vmem %s0, 6
    %v416 = vld [vmem:[%s415] sm:$0x3]
    %v417 = vunpack.c.l.bf16 %v416
    %419 = vrot.lane.b32.xlu0 %v414, 64
    %v420 = vpop.permute.xlu0 %419
    %v422 = vsel %vm86, %v420, 0
    %424 = vmatprep.subr.bf16.mxu0 0
    %425 = vmatpush1.bf16.msra.mxu0 0
    %426 = vmatprep.subr.bf16.mxu0 0
    %427 = vmatpush1.bf16.msra.mxu0 0
    %428 = vmatprep.subr.bf16.mxu0 0
    %429 = vmatpush1.bf16.msra.mxu0 0
    %430 = vmatprep.subr.bf16.mxu0 0
    %431 = vmatpush1.bf16.msra.mxu0 0
    %432 = vmatprep.subr.bf16.mxu0 %v77
    %433 = vmatpush1.bf16.msra.mxu0 %v76
    %434 = vmatprep.subr.bf16.mxu0 %v75
    %435 = vmatpush1.bf16.msra.mxu0 %v74
    %436 = vmatprep.subr.bf16.mxu0 %v73
    %437 = vmatpush1.bf16.msra.mxu0 %v72
    %438 = vmatprep.subr.bf16.mxu0 %v71
    %439 = vmatpush1.bf16.msra.mxu0 %v70
    %440 = vmatprep.subr.bf16.mxu0 0
    %441 = vmatpush2.bf16.msra.mxu0 0
    %442 = vmatprep.subr.bf16.mxu0 0
    %443 = vmatpush2.bf16.msra.mxu0 0
    %444 = vmatprep.subr.bf16.mxu0 0
    %445 = vmatpush2.bf16.msra.mxu0 0
    %446 = vmatprep.subr.bf16.mxu0 0
    %447 = vmatpush2.bf16.msra.mxu0 0
    %448 = vmatprep.subr.bf16.mxu0 0
    %449 = vmatpush2.bf16.msra.mxu0 0
    %450 = vmatprep.subr.bf16.mxu0 0
    %451 = vmatpush2.bf16.msra.mxu0 0
    %452 = vmatprep.subr.bf16.mxu0 0
    %453 = vmatpush2.bf16.msra.mxu0 0
    %454 = vmatprep.subr.bf16.mxu0 0
    %455 = vmatpush2.bf16.msra.mxu0 0
    %456 = vmatprep.mubr.bf16.mxu0 0
    %457 = vmatmul.mubr.bf16.gmra.mxu0 %v422
    %v458 = vpop.f32.mrf.mxu0
    %v459 = vadd.f32 0.0, %v458
    %v460 = vpop.f32.mrf.mxu0
    %v461 = vadd.f32 0.0, %v460
    %v462 = vpop.f32.mrf.mxu0
    %v463 = vpop.f32.mrf.mxu0
    %464 = vdwg.mxu0
    %v467 = vcombine.low %v459, %v461
    %v469 = vunpack.c.l.s4 1983009808
    %v470 = vunpack.c.0.s8 %v469
    %v471 = vlaneseq
    %v472 = vshrl.u32 %v471, 7
    %v473 = vsub.s32 %v470, %v472
    %v474 = vrot.slane %v467, %v473
    %v476 = vadd.f32 %v417, %v474
    %v477 = vadd.f32 %v476, %v159
    %v478 = vxor.u32 %v477, 2147483648
    %v479 = vmul.f32 %v478, 1.442695
    %v480 = vpow.pop %v479
    %v481 = vadd.f32 %v480, 1.0
    %v482 = vrcp.pop %v481
    %v483 = vmul.f32 1.0, %v482
    %v484 = vtanh.pop %v477
    %v487 = vunpack.c.l.s4 1983009808
    %v488 = vunpack.c.0.s8 %v487
    %v489 = vlaneseq
    %v490 = vshrl.u32 %v489, 7
    %v491 = vsub.s32 %v488, %v490
    %v492 = vrot.slane %v484, %v491
    %v493 = vcombine.high %v492, %v492
    %v498 = vunpack.c.l.s4 1983009808
    %v499 = vunpack.c.0.s8 %v498
    %v500 = vlaneseq
    %v501 = vshrl.u32 %v500, 7
    %v502 = vsub.s32 %v499, %v501
    %v503 = vrot.slane %v483, %v502
    %v504 = vcombine.high %v503, %v503
    %v507 = vsel %vm40, %v492, %v503
    %v508 = vsel %vm41, %v493, %v504
    %v509 = vmul.f32 %v507, %v411
    %v510 = vmul.f32 %v507, %v508
    %512 = vrot.lane.b32.xlu0 %v510, 64
    %v513 = vpop.permute.xlu0 %512
    %v515 = vadd.f32 %v509, %v513
    %v516 = vtanh.pop %v515
    %v517 = vmul.f32 %v508, %v516
    %v518 = vpack.c.bf16 %v517, %v517
    %s519 = scalar_lea.vmem %s0, 8
    %v520 = vld [vmem:[%s519] sm:$0x3]
    %v521 = vunpack.c.l.bf16 %v520
    %523 = vrot.lane.b32.xlu0 %v518, 64
    %v524 = vpop.permute.xlu0 %523
    %v526 = vsel %vm86, %v524, 0
    %528 = vmatprep.subr.bf16.mxu0 0
    %529 = vmatpush1.bf16.msra.mxu0 0
    %530 = vmatprep.subr.bf16.mxu0 0
    %531 = vmatpush1.bf16.msra.mxu0 0
    %532 = vmatprep.subr.bf16.mxu0 0
    %533 = vmatpush1.bf16.msra.mxu0 0
    %534 = vmatprep.subr.bf16.mxu0 0
    %535 = vmatpush1.bf16.msra.mxu0 0
    %536 = vmatprep.subr.bf16.mxu0 %v77
    %537 = vmatpush1.bf16.msra.mxu0 %v76
    %538 = vmatprep.subr.bf16.mxu0 %v75
    %539 = vmatpush1.bf16.msra.mxu0 %v74
    %540 = vmatprep.subr.bf16.mxu0 %v73
    %541 = vmatpush1.bf16.msra.mxu0 %v72
    %542 = vmatprep.subr.bf16.mxu0 %v71
    %543 = vmatpush1.bf16.msra.mxu0 %v70
    %544 = vmatprep.subr.bf16.mxu0 0
    %545 = vmatpush2.bf16.msra.mxu0 0
    %546 = vmatprep.subr.bf16.mxu0 0
    %547 = vmatpush2.bf16.msra.mxu0 0
    %548 = vmatprep.subr.bf16.mxu0 0
    %549 = vmatpush2.bf16.msra.mxu0 0
    %550 = vmatprep.subr.bf16.mxu0 0
    %551 = vmatpush2.bf16.msra.mxu0 0
    %552 = vmatprep.subr.bf16.mxu0 0
    %553 = vmatpush2.bf16.msra.mxu0 0
    %554 = vmatprep.subr.bf16.mxu0 0
    %555 = vmatpush2.bf16.msra.mxu0 0
    %556 = vmatprep.subr.bf16.mxu0 0
    %557 = vmatpush2.bf16.msra.mxu0 0
    %558 = vmatprep.subr.bf16.mxu0 0
    %559 = vmatpush2.bf16.msra.mxu0 0
    %560 = vmatprep.mubr.bf16.mxu0 0
    %561 = vmatmul.mubr.bf16.gmra.mxu0 %v526
    %v562 = vpop.f32.mrf.mxu0
    %v563 = vadd.f32 0.0, %v562
    %v564 = vpop.f32.mrf.mxu0
    %v565 = vadd.f32 0.0, %v564
    %v566 = vpop.f32.mrf.mxu0
    %v567 = vpop.f32.mrf.mxu0
    %568 = vdwg.mxu0
    %v571 = vcombine.low %v563, %v565
    %v573 = vunpack.c.l.s4 1983009808
    %v574 = vunpack.c.0.s8 %v573
    %v575 = vlaneseq
    %v576 = vshrl.u32 %v575, 7
    %v577 = vsub.s32 %v574, %v576
    %v578 = vrot.slane %v571, %v577
    %v580 = vadd.f32 %v521, %v578
    %v581 = vadd.f32 %v580, %v159
    %v582 = vxor.u32 %v581, 2147483648
    %v583 = vmul.f32 %v582, 1.442695
    %v584 = vpow.pop %v583
    %v585 = vadd.f32 %v584, 1.0
    %v586 = vrcp.pop %v585
    %v587 = vmul.f32 1.0, %v586
    %v588 = vtanh.pop %v581
    %v591 = vunpack.c.l.s4 1983009808
    %v592 = vunpack.c.0.s8 %v591
    %v593 = vlaneseq
    %v594 = vshrl.u32 %v593, 7
    %v595 = vsub.s32 %v592, %v594
    %v596 = vrot.slane %v588, %v595
    %v597 = vcombine.high %v596, %v596
    %v602 = vunpack.c.l.s4 1983009808
    %v603 = vunpack.c.0.s8 %v602
    %v604 = vlaneseq
    %v605 = vshrl.u32 %v604, 7
    %v606 = vsub.s32 %v603, %v605
    %v607 = vrot.slane %v587, %v606
    %v608 = vcombine.high %v607, %v607
    %v611 = vsel %vm40, %v596, %v607
    %v612 = vsel %vm41, %v597, %v608
    %v613 = vmul.f32 %v611, %v515
    %v614 = vmul.f32 %v611, %v612
    %616 = vrot.lane.b32.xlu0 %v614, 64
    %v617 = vpop.permute.xlu0 %616
    %v619 = vadd.f32 %v613, %v617
    %v620 = vtanh.pop %v619
    %v621 = vmul.f32 %v612, %v620
    %v622 = vpack.c.bf16 %v621, %v621
    %s623 = scalar_lea.vmem %s0, 10
    %v624 = vld [vmem:[%s623] sm:$0x3]
    %v625 = vunpack.c.l.bf16 %v624
    %627 = vrot.lane.b32.xlu0 %v622, 64
    %v628 = vpop.permute.xlu0 %627
    %v630 = vsel %vm86, %v628, 0
    %632 = vmatprep.subr.bf16.mxu0 0
    %633 = vmatpush1.bf16.msra.mxu0 0
    %634 = vmatprep.subr.bf16.mxu0 0
    %635 = vmatpush1.bf16.msra.mxu0 0
    %636 = vmatprep.subr.bf16.mxu0 0
    %637 = vmatpush1.bf16.msra.mxu0 0
    %638 = vmatprep.subr.bf16.mxu0 0
    %639 = vmatpush1.bf16.msra.mxu0 0
    %640 = vmatprep.subr.bf16.mxu0 %v77
    %641 = vmatpush1.bf16.msra.mxu0 %v76
    %642 = vmatprep.subr.bf16.mxu0 %v75
    %643 = vmatpush1.bf16.msra.mxu0 %v74
    %644 = vmatprep.subr.bf16.mxu0 %v73
    %645 = vmatpush1.bf16.msra.mxu0 %v72
    %646 = vmatprep.subr.bf16.mxu0 %v71
    %647 = vmatpush1.bf16.msra.mxu0 %v70
    %648 = vmatprep.subr.bf16.mxu0 0
    %649 = vmatpush2.bf16.msra.mxu0 0
    %650 = vmatprep.subr.bf16.mxu0 0
    %651 = vmatpush2.bf16.msra.mxu0 0
    %652 = vmatprep.subr.bf16.mxu0 0
    %653 = vmatpush2.bf16.msra.mxu0 0
    %654 = vmatprep.subr.bf16.mxu0 0
    %655 = vmatpush2.bf16.msra.mxu0 0
    %656 = vmatprep.subr.bf16.mxu0 0
    %657 = vmatpush2.bf16.msra.mxu0 0
    %658 = vmatprep.subr.bf16.mxu0 0
    %659 = vmatpush2.bf16.msra.mxu0 0
    %660 = vmatprep.subr.bf16.mxu0 0
    %661 = vmatpush2.bf16.msra.mxu0 0
    %662 = vmatprep.subr.bf16.mxu0 0
    %663 = vmatpush2.bf16.msra.mxu0 0
    %664 = vmatprep.mubr.bf16.mxu0 0
    %665 = vmatmul.mubr.bf16.gmra.mxu0 %v630
    %v666 = vpop.f32.mrf.mxu0
    %v667 = vadd.f32 0.0, %v666
    %v668 = vpop.f32.mrf.mxu0
    %v669 = vadd.f32 0.0, %v668
    %v670 = vpop.f32.mrf.mxu0
    %v671 = vpop.f32.mrf.mxu0
    %672 = vdwg.mxu0
    %v675 = vcombine.low %v667, %v669
    %v677 = vunpack.c.l.s4 1983009808
    %v678 = vunpack.c.0.s8 %v677
    %v679 = vlaneseq
    %v680 = vshrl.u32 %v679, 7
    %v681 = vsub.s32 %v678, %v680
    %v682 = vrot.slane %v675, %v681
    %v684 = vadd.f32 %v625, %v682
    %v685 = vadd.f32 %v684, %v159
    %v686 = vxor.u32 %v685, 2147483648
    %v687 = vmul.f32 %v686, 1.442695
    %v688 = vpow.pop %v687
    %v689 = vadd.f32 %v688, 1.0
    %v690 = vrcp.pop %v689
    %v691 = vmul.f32 1.0, %v690
    %v692 = vtanh.pop %v685
    %v695 = vunpack.c.l.s4 1983009808
    %v696 = vunpack.c.0.s8 %v695
    %v697 = vlaneseq
    %v698 = vshrl.u32 %v697, 7
    %v699 = vsub.s32 %v696, %v698
    %v700 = vrot.slane %v692, %v699
    %v701 = vcombine.high %v700, %v700
    %v706 = vunpack.c.l.s4 1983009808
    %v707 = vunpack.c.0.s8 %v706
    %v708 = vlaneseq
    %v709 = vshrl.u32 %v708, 7
    %v710 = vsub.s32 %v707, %v709
    %v711 = vrot.slane %v691, %v710
    %v712 = vcombine.high %v711, %v711
    %v715 = vsel %vm40, %v700, %v711
    %v716 = vsel %vm41, %v701, %v712
    %v717 = vmul.f32 %v715, %v619
    %v718 = vmul.f32 %v715, %v716
    %720 = vrot.lane.b32.xlu0 %v718, 64
    %v721 = vpop.permute.xlu0 %720
    %v723 = vadd.f32 %v717, %v721
    %v724 = vtanh.pop %v723
    %v725 = vmul.f32 %v716, %v724
    %v726 = vpack.c.bf16 %v725, %v725
    %s727 = scalar_lea.vmem %s0, 12
    %v728 = vld [vmem:[%s727] sm:$0x3]
    %v729 = vunpack.c.l.bf16 %v728
    %731 = vrot.lane.b32.xlu0 %v726, 64
    %v732 = vpop.permute.xlu0 %731
    %v734 = vsel %vm86, %v732, 0
    %736 = vmatprep.subr.bf16.mxu0 0
    %737 = vmatpush1.bf16.msra.mxu0 0
    %738 = vmatprep.subr.bf16.mxu0 0
    %739 = vmatpush1.bf16.msra.mxu0 0
    %740 = vmatprep.subr.bf16.mxu0 0
    %741 = vmatpush1.bf16.msra.mxu0 0
    %742 = vmatprep.subr.bf16.mxu0 0
    %743 = vmatpush1.bf16.msra.mxu0 0
    %744 = vmatprep.subr.bf16.mxu0 %v77
    %745 = vmatpush1.bf16.msra.mxu0 %v76
    %746 = vmatprep.subr.bf16.mxu0 %v75
    %747 = vmatpush1.bf16.msra.mxu0 %v74
    %748 = vmatprep.subr.bf16.mxu0 %v73
    %749 = vmatpush1.bf16.msra.mxu0 %v72
    %750 = vmatprep.subr.bf16.mxu0 %v71
    %751 = vmatpush1.bf16.msra.mxu0 %v70
    %752 = vmatprep.subr.bf16.mxu0 0
    %753 = vmatpush2.bf16.msra.mxu0 0
    %754 = vmatprep.subr.bf16.mxu0 0
    %755 = vmatpush2.bf16.msra.mxu0 0
    %756 = vmatprep.subr.bf16.mxu0 0
    %757 = vmatpush2.bf16.msra.mxu0 0
    %758 = vmatprep.subr.bf16.mxu0 0
    %759 = vmatpush2.bf16.msra.mxu0 0
    %760 = vmatprep.subr.bf16.mxu0 0
    %761 = vmatpush2.bf16.msra.mxu0 0
    %762 = vmatprep.subr.bf16.mxu0 0
    %763 = vmatpush2.bf16.msra.mxu0 0
    %764 = vmatprep.subr.bf16.mxu0 0
    %765 = vmatpush2.bf16.msra.mxu0 0
    %766 = vmatprep.subr.bf16.mxu0 0
    %767 = vmatpush2.bf16.msra.mxu0 0
    %768 = vmatprep.mubr.bf16.mxu0 0
    %769 = vmatmul.mubr.bf16.gmra.mxu0 %v734
    %v770 = vpop.f32.mrf.mxu0
    %v771 = vadd.f32 0.0, %v770
    %v772 = vpop.f32.mrf.mxu0
    %v773 = vadd.f32 0.0, %v772
    %v774 = vpop.f32.mrf.mxu0
    %v775 = vpop.f32.mrf.mxu0
    %776 = vdwg.mxu0
    %v779 = vcombine.low %v771, %v773
    %v781 = vunpack.c.l.s4 1983009808
    %v782 = vunpack.c.0.s8 %v781
    %v783 = vlaneseq
    %v784 = vshrl.u32 %v783, 7
    %v785 = vsub.s32 %v782, %v784
    %v786 = vrot.slane %v779, %v785
    %v788 = vadd.f32 %v729, %v786
    %v789 = vadd.f32 %v788, %v159
    %v790 = vxor.u32 %v789, 2147483648
    %v791 = vmul.f32 %v790, 1.442695
    %v792 = vpow.pop %v791
    %v793 = vadd.f32 %v792, 1.0
    %v794 = vrcp.pop %v793
    %v795 = vmul.f32 1.0, %v794
    %v796 = vtanh.pop %v789
    %v799 = vunpack.c.l.s4 1983009808
    %v800 = vunpack.c.0.s8 %v799
    %v801 = vlaneseq
    %v802 = vshrl.u32 %v801, 7
    %v803 = vsub.s32 %v800, %v802
    %v804 = vrot.slane %v796, %v803
    %v805 = vcombine.high %v804, %v804
    %v810 = vunpack.c.l.s4 1983009808
    %v811 = vunpack.c.0.s8 %v810
    %v812 = vlaneseq
    %v813 = vshrl.u32 %v812, 7
    %v814 = vsub.s32 %v811, %v813
    %v815 = vrot.slane %v795, %v814
    %v816 = vcombine.high %v815, %v815
    %v819 = vsel %vm40, %v804, %v815
    %v820 = vsel %vm41, %v805, %v816
    %v821 = vmul.f32 %v819, %v723
    %v822 = vmul.f32 %v819, %v820
    %824 = vrot.lane.b32.xlu0 %v822, 64
    %v825 = vpop.permute.xlu0 %824
    %v827 = vadd.f32 %v821, %v825
    %v828 = vtanh.pop %v827
    %v829 = vmul.f32 %v820, %v828
    %v830 = vpack.c.bf16 %v829, %v829
    %s831 = scalar_lea.vmem %s0, 14
    %v832 = vld [vmem:[%s831] sm:$0x3]
    %v833 = vunpack.c.l.bf16 %v832
    %835 = vrot.lane.b32.xlu0 %v830, 64
    %v836 = vpop.permute.xlu0 %835
    %v838 = vsel %vm86, %v836, 0
    %840 = vmatprep.subr.bf16.mxu0 0
    %841 = vmatpush1.bf16.msra.mxu0 0
    %842 = vmatprep.subr.bf16.mxu0 0
    %843 = vmatpush1.bf16.msra.mxu0 0
    %844 = vmatprep.subr.bf16.mxu0 0
    %845 = vmatpush1.bf16.msra.mxu0 0
    %846 = vmatprep.subr.bf16.mxu0 0
    %847 = vmatpush1.bf16.msra.mxu0 0
    %848 = vmatprep.subr.bf16.mxu0 %v77
    %849 = vmatpush1.bf16.msra.mxu0 %v76
    %850 = vmatprep.subr.bf16.mxu0 %v75
    %851 = vmatpush1.bf16.msra.mxu0 %v74
    %852 = vmatprep.subr.bf16.mxu0 %v73
    %853 = vmatpush1.bf16.msra.mxu0 %v72
    %854 = vmatprep.subr.bf16.mxu0 %v71
    %855 = vmatpush1.bf16.msra.mxu0 %v70
    %856 = vmatprep.subr.bf16.mxu0 0
    %857 = vmatpush2.bf16.msra.mxu0 0
    %858 = vmatprep.subr.bf16.mxu0 0
    %859 = vmatpush2.bf16.msra.mxu0 0
    %860 = vmatprep.subr.bf16.mxu0 0
    %861 = vmatpush2.bf16.msra.mxu0 0
    %862 = vmatprep.subr.bf16.mxu0 0
    %863 = vmatpush2.bf16.msra.mxu0 0
    %864 = vmatprep.subr.bf16.mxu0 0
    %865 = vmatpush2.bf16.msra.mxu0 0
    %866 = vmatprep.subr.bf16.mxu0 0
    %867 = vmatpush2.bf16.msra.mxu0 0
    %868 = vmatprep.subr.bf16.mxu0 0
    %869 = vmatpush2.bf16.msra.mxu0 0
    %870 = vmatprep.subr.bf16.mxu0 0
    %871 = vmatpush2.bf16.msra.mxu0 0
    %872 = vmatprep.mubr.bf16.mxu0 0
    %873 = vmatmul.mubr.bf16.gmra.mxu0 %v838
    %v874 = vpop.f32.mrf.mxu0
    %v875 = vadd.f32 0.0, %v874
    %v876 = vpop.f32.mrf.mxu0
    %v877 = vadd.f32 0.0, %v876
    %v878 = vpop.f32.mrf.mxu0
    %v879 = vpop.f32.mrf.mxu0
    %880 = vdwg.mxu0
    %v883 = vcombine.low %v875, %v877
    %v885 = vunpack.c.l.s4 1983009808
    %v886 = vunpack.c.0.s8 %v885
    %v887 = vlaneseq
    %v888 = vshrl.u32 %v887, 7
    %v889 = vsub.s32 %v886, %v888
    %v890 = vrot.slane %v883, %v889
    %v892 = vadd.f32 %v833, %v890
    %v893 = vadd.f32 %v892, %v159
    %v894 = vxor.u32 %v893, 2147483648
    %v895 = vmul.f32 %v894, 1.442695
    %v896 = vpow.pop %v895
    %v897 = vadd.f32 %v896, 1.0
    %v898 = vrcp.pop %v897
    %v899 = vmul.f32 1.0, %v898
    %v900 = vtanh.pop %v893
    %v903 = vunpack.c.l.s4 1983009808
    %v904 = vunpack.c.0.s8 %v903
    %v905 = vlaneseq
    %v906 = vshrl.u32 %v905, 7
    %v907 = vsub.s32 %v904, %v906
    %v908 = vrot.slane %v900, %v907
    %v909 = vcombine.high %v908, %v908
    %v914 = vunpack.c.l.s4 1983009808
    %v915 = vunpack.c.0.s8 %v914
    %v916 = vlaneseq
    %v917 = vshrl.u32 %v916, 7
    %v918 = vsub.s32 %v915, %v917
    %v919 = vrot.slane %v899, %v918
    %v920 = vcombine.high %v919, %v919
    %v923 = vsel %vm40, %v908, %v919
    %v924 = vsel %vm41, %v909, %v920
    %v925 = vmul.f32 %v923, %v827
    %v926 = vmul.f32 %v923, %v924
    %928 = vrot.lane.b32.xlu0 %v926, 64
    %v929 = vpop.permute.xlu0 %928
    %v931 = vadd.f32 %v925, %v929
    %v932 = vtanh.pop %v931
    %v933 = vmul.f32 %v924, %v932
    %v934 = vpack.c.bf16 %v933, %v933
    %v937 = vunpack.c.l.s4 1966171168
    %v938 = vunpack.c.0.s8 %v937
    %v939 = vlaneseq
    %v940 = vshrl.u32 %v939, 7
    %v941 = vsub.s32 %v938, %v940
    %v942 = vrot.slane %v934, %v941
    %v944 = vunpack.c.l.s4 1966171168
    %v945 = vunpack.c.0.s8 %v944
    %v946 = vlaneseq
    %v947 = vshrl.u32 %v946, 7
    %v948 = vsub.s32 %v945, %v947
    %v949 = vrot.slane %v942, %v948
    %950 = vrot.lane.b32.xlu0 %v949, 64
    %v951 = vpop.permute.xlu0 %950
    %vm953 = vcmask 516096
    %954 = vst.msk [vmem:[#allocation2] sm:$0x1] %vm953, %v951
    %956 = vrot.lane.b32.xlu0 %v931, 64
    %v957 = vpop.permute.xlu0 %956
    %vm959 = vcmask 517120
    %960 = vst.msk [vmem:[#allocation3] sm:$0x3] %vm959, %v957
    // Predicated region
    $region18: #{encoder_forward.1} parent=1 // pred_check
      %p961 = pneg %p16
    $region19: #{encoder_forward.1} parent=1 // pred_check_branch
      %963 = sbr.rel (%p961) target = $region21
    $region20: #{encoder_forward.1} parent=1 // pred_region
      %v964 = vunpack.c.l.bf16 %v934
      %966 = vrot.lane.b32.xlu0 %v964, 64
      %v967 = vpop.permute.xlu0 %966
      %969 = vst.msk [vmem:[#allocation4] sm:$0x3] %vm959, %v967
    $region21: #{encoder_forward.1} parent=1 // pred_fallthru
      _
    // Predicated region
    $region22: #{encoder_forward.1} parent=1 // pred_check
      _
    $region23: #{encoder_forward.1} parent=1 // pred_check_branch
      %971 = sbr.rel (0) target = $region25
    $region24: #{encoder_forward.1} parent=1 // pred_region
      %s973 = ssub.s32 32, 32
      %974 = vsyncadd [#allocation5], %s973
      %s976 = sshll.u32 [#allocation4], 4
      %s977 = int_to_ptr.vmem [resolvable:$true] %s976
      %979 = dma.vmem_to_hbm [thread:$0]  %s977, 32, %s3, [#allocation5]
    $region25: #{encoder_forward.1} parent=1 // pred_fallthru
      _
    // Predicated region
    $region26: #{encoder_forward.1} parent=1 // pred_check
      _
    $region27: #{encoder_forward.1} parent=1 // pred_check_branch
      %981 = sbr.rel (0) target = $region29
    $region28: #{encoder_forward.1} parent=1 // pred_region
      %982 = dma.done [#allocation5], 32
    $region29: #{encoder_forward.1} parent=1 // pred_fallthru
      _
    %983 = vsyncpa [#allocation5], 1

</llo_original>
